<compile_context>
chip_gen: v7x
topology: tpu7x:2x2x1
jax: 0.10.0
libtpu: 0.0.40
codegen_flags: <defaults>
</compile_context>

<pallas_src>
import functools

import jax
import jax.numpy as jnp
import numpy as np
from jax import lax
from jax.experimental import pallas as pl
from jax.experimental.pallas import tpu as pltpu


def _round_up(x, m):
    return ((x + m - 1) // m) * m


def query_encoder_kernel(qids_ref, w_ref, table_ref, out_ref, tok_buf,
                         *, tb, s_len):
    """One batch tile.

    qids_ref : (Bp*S,) int32, SMEM (scalar prefetch) -- flattened token ids.
    w_ref    : (tb, S, 1) f32, VMEM -- gathered per-token weights for this tile.
    table_ref: (Vp, Dp) VMEM -- resident token-embedding table.
    out_ref  : (tb, Dp) -- encoded queries for this tile.
    tok_buf  : (tb*S, Dp) VMEM scratch -- gathered token embeddings (flat rows).
    """
    b = pl.program_id(0)
    n = tb * s_len
    base = b * n

    # Softmax statistics on the tiny per-token weights (vectorized).  Keep the
    # trailing singleton so S stays on sublanes and the later broadcast against
    # (tb, S, Dp) tokens is a pure lane broadcast.
    w = w_ref[...].astype(jnp.float32)                  # (tb, S, 1)
    m = jnp.max(w, axis=1, keepdims=True)               # (tb, 1, 1)
    p = jnp.exp(w - m)                                  # (tb, S, 1) unnormalized
    denom = jnp.sum(p, axis=1, keepdims=True)           # (tb, 1, 1)

    # Fused embedding gather from the VMEM-resident table: one dynamic (1, Dp)
    # VMEM load + store per (row, position).  No HBM DMAs, no semaphores.
    def gather_one(i, carry):
        tok_id = qids_ref[base + i]                     # scalar from SMEM
        tok_buf[pl.ds(i, 1), :] = table_ref[pl.ds(tok_id, 1), :]
        return carry

    if n <= 128:
        # Small tile: static unroll (full LLO scheduler visibility).
        for i in range(n):
            gather_one(i, 0)
    else:
        lax.fori_loop(0, n, gather_one, 0, unroll=8)

    # Weighted sum over the sequence with deferred, exact normalization: divide
    # the small (tb, Dp) accumulator instead of normalizing (tb, S) weights.
    t = tok_buf[...].reshape(tb, s_len, -1).astype(jnp.float32)   # (tb, S, Dp)
    acc = jnp.sum(p * t, axis=1)                                  # (tb, Dp)
    out_ref[...] = (acc / denom[:, 0, :]).astype(out_ref.dtype)


def query_encoder_forward(query, token_embed_table, weight_table, *, tb=64):
    """query: (B, S) int token ids.
    token_embed_table: (V, D) float.  weight_table: (V, 1) float.
    Returns (B, D) encoded queries."""
    B, S = query.shape
    V, D = token_embed_table.shape
    out_dtype = token_embed_table.dtype
    itemsize = jnp.dtype(out_dtype).itemsize

    # Lane-dense embedding dim, sublane-aligned vocab for the resident table.
    Dp = _round_up(D, 128)
    Vp = _round_up(V, 8)
    if (Vp, Dp) != (V, D):
        token_embed_table = jnp.pad(token_embed_table,
                                    ((0, Vp - V), (0, Dp - D)))

    # Clamp ids so no gather can go out of bounds; pad the batch to the tile.
    # Clamp the tile itself so tiny demo batches don't waste a 64-row tile.
    query = jnp.clip(query.astype(jnp.int32), 0, V - 1)
    tb = max(8, min(_round_up(tb, 8), _round_up(B, 8)))
    Bp = _round_up(B, tb)
    if Bp != B:
        query = jnp.pad(query, ((0, Bp - B), (0, 0)))    # padded rows use id 0

    # Per-token scalar weights stay as XLA glue: only B*S*4 bytes moved.
    token_weights = jnp.take(weight_table, query, axis=0).astype(jnp.float32)  # (Bp, S, 1)

    # Flat 1-D ids avoid the 16x SMEM lane padding of a 2-D (Bp, S) array.
    qids_flat = query.reshape(-1)

    nb = Bp // tb
    kernel = functools.partial(query_encoder_kernel, tb=tb, s_len=S)

    cost = pl.CostEstimate(
        flops=2 * Bp * S * Dp,
        transcendentals=Bp * S,
        bytes_accessed=Vp * Dp * itemsize + 2 * Bp * S * 4 + Bp * Dp * itemsize,
    )

    # Rough VMEM footprint: resident table (pipeline may double-buffer it),
    # weights + output double buffers, and the gather scratch.
    est_vmem = (2 * Vp * Dp * itemsize
                + 2 * tb * S * 128 * 4            # (tb, S, 1) weights, lane-padded
                + tb * S * Dp * itemsize          # tok_buf
                + 2 * tb * Dp * itemsize)         # output
    compiler_kwargs = dict(dimension_semantics=("parallel",))
    if est_vmem > 16 * 1024 * 1024:
        # TODO(synk): prefer a bf16 table on v7x (64 MiB physical VMEM).
        compiler_kwargs["vmem_limit_bytes"] = min(int(est_vmem * 5 // 4),
                                                  96 * 1024 * 1024)

    out = pl.pallas_call(
        kernel,
        out_shape=jax.ShapeDtypeStruct((Bp, Dp), out_dtype),
        grid_spec=pltpu.PrefetchScalarGridSpec(
            num_scalar_prefetch=1,                        # flat token ids -> SMEM
            grid=(nb,),
            in_specs=[
                pl.BlockSpec((tb, S, 1), lambda b, qids: (b, 0, 0)),   # weights
                pl.BlockSpec((Vp, Dp), lambda b, qids: (0, 0)),        # resident table
            ],
            out_specs=pl.BlockSpec((tb, Dp), lambda b, qids: (b, 0)),
            scratch_shapes=[
                pltpu.VMEM((tb * S, Dp), out_dtype),       # gathered token rows
            ],
        ),
        compiler_params=pltpu.CompilerParams(**compiler_kwargs),
        cost_estimate=cost,
    )(qids_flat, token_weights, token_embed_table)

    return out[:B, :D]


def reference_forward(query, token_embed_table, weight_table):
    qt = jnp.take(token_embed_table, query, axis=0)                # (B, S, D)
    tw = jnp.take(weight_table, query, axis=0)                     # (B, S, 1)
    nw = jax.nn.softmax(tw, axis=1)                                # (B, S, 1)
    return jnp.sum(nw * qt, axis=1)                                # (B, D)


if __name__ == "__main__":
    key = jax.random.PRNGKey(0)
    k_embed, k_w, k_query = jax.random.split(key, 3)

    VOCAB, D = 50, 128     # lane-dense embedding dim (multiple of 128)
    B, S = 2, 8

    # query_token_embeds.weight: (VOCAB, D)
    token_embed_table = jax.random.normal(k_embed, (VOCAB, D), dtype=jnp.float32)

    # self.weights: CustomEmbedding(VOCAB, 1) with xavier_normal init.
    xavier_std = float(np.sqrt(2.0 / (VOCAB + 1)))
    weight_table = xavier_std * jax.random.normal(k_w, (VOCAB, 1), dtype=jnp.float32)

    # query: (B, S) int token ids
    query = jax.random.randint(k_query, (B, S), 0, VOCAB, dtype=jnp.int32)

    out = query_encoder_forward(query, token_embed_table, weight_table)
    out = jax.block_until_ready(out)

    ref = reference_forward(query, token_embed_table, weight_table)
    assert out.shape == (B, D)
    # Exact softmax normalization now (no approximate reciprocal), so the
    # tolerance is tight.
    np.testing.assert_allclose(np.asarray(out), np.asarray(ref),
                               rtol=1e-5, atol=1e-5)

    print("KERNEL_OK")
</pallas_src>

<mosaic_0001>
module attributes {stable_mosaic.version = 11 : i64} {
  func.func @query_encoder_kernel(%arg0: i32, %arg1: memref<64xi32, #tpu.memory_space<smem>>, %arg2: memref<8x8x1xf32, #tpu.memory_space<vmem>>, %arg3: memref<56x128xf32, #tpu.memory_space<vmem>>, %arg4: memref<8x128xf32, #tpu.memory_space<vmem>>, %arg5: memref<64x128xf32, #tpu.memory_space<vmem>>) attributes {dimension_semantics = [#tpu.dimension_semantics<parallel>], iteration_bounds = array<i64: 1>, scalar_prefetch = 1 : i64, scratch_operands = 1 : i64, tpu.core_type = #tpu.core_type<tc>, window_params = [{transform_indices = @transform_0, window_bounds = array<i64: 8, 8, 1>}, {pipeline_mode = #tpu.pipeline_mode<synchronous>, transform_indices = @transform_1, window_bounds = array<i64: 56, 128>}, {transform_indices = @transform_2, window_bounds = array<i64: 8, 128>}]} {
    %c64_i32 = arith.constant 64 : i32
    %0 = arith.muli %arg0, %c64_i32 : i32
    %c0 = arith.constant 0 : index
    %c0_0 = arith.constant 0 : index
    %c0_1 = arith.constant 0 : index
    %1 = vector.load %arg2[%c0, %c0_0, %c0_1] : memref<8x8x1xf32, #tpu.memory_space<vmem>>, vector<8x8x1xf32>
    %cst = arith.constant dense<0xFF800000> : vector<8x1xf32>
    %2 = vector.multi_reduction <maximumf>, %1, %cst [1] : vector<8x8x1xf32> to vector<8x1xf32>
    %3 = vector.shape_cast %2 : vector<8x1xf32> to vector<8x1x1xf32>
    %4 = vector.broadcast %3 : vector<8x1x1xf32> to vector<8x8x1xf32>
    %5 = arith.subf %1, %4 : vector<8x8x1xf32>
    %6 = math.exp %5 : vector<8x8x1xf32>
    %cst_2 = arith.constant dense<0.000000e+00> : vector<8x1xf32>
    %7 = vector.multi_reduction <add>, %6, %cst_2 [1] : vector<8x8x1xf32> to vector<8x1xf32>
    %8 = vector.shape_cast %7 : vector<8x1xf32> to vector<8x1x1xf32>
    %c0_i32 = arith.constant 0 : i32
    %9 = arith.addi %0, %c0_i32 : i32
    %10 = arith.index_cast %9 : i32 to index
    %11 = memref.load %arg1[%10] : memref<64xi32, #tpu.memory_space<smem>>
    %12 = arith.index_cast %11 : i32 to index
    %c0_3 = arith.constant 0 : index
    %13 = vector.load %arg3[%12, %c0_3] : memref<56x128xf32, #tpu.memory_space<vmem>>, vector<1x128xf32>
    %c0_4 = arith.constant 0 : index
    %c0_5 = arith.constant 0 : index
    %14 = vector.load %arg5[%c0_4, %c0_5] : memref<64x128xf32, #tpu.memory_space<vmem>>, vector<1x128xf32>
    tpu.vector_store %arg5[%c0_4, %c0_5], %13 {strides = array<i32>} : memref<64x128xf32, #tpu.memory_space<vmem>>, vector<1x128xf32>,
    %c1_i32 = arith.constant 1 : i32
    %15 = arith.addi %0, %c1_i32 : i32
    %16 = arith.index_cast %15 : i32 to index
    %17 = memref.load %arg1[%16] : memref<64xi32, #tpu.memory_space<smem>>
    %18 = arith.index_cast %17 : i32 to index
    %c0_6 = arith.constant 0 : index
    %19 = vector.load %arg3[%18, %c0_6] : memref<56x128xf32, #tpu.memory_space<vmem>>, vector<1x128xf32>
    %c1 = arith.constant 1 : index
    %c0_7 = arith.constant 0 : index
    %20 = vector.load %arg5[%c1, %c0_7] : memref<64x128xf32, #tpu.memory_space<vmem>>, vector<1x128xf32>
    tpu.vector_store %arg5[%c1, %c0_7], %19 {strides = array<i32>} : memref<64x128xf32, #tpu.memory_space<vmem>>, vector<1x128xf32>,
    %c2_i32 = arith.constant 2 : i32
    %21 = arith.addi %0, %c2_i32 : i32
    %22 = arith.index_cast %21 : i32 to index
    %23 = memref.load %arg1[%22] : memref<64xi32, #tpu.memory_space<smem>>
    %24 = arith.index_cast %23 : i32 to index
    %c0_8 = arith.constant 0 : index
    %25 = vector.load %arg3[%24, %c0_8] : memref<56x128xf32, #tpu.memory_space<vmem>>, vector<1x128xf32>
    %c2 = arith.constant 2 : index
    %c0_9 = arith.constant 0 : index
    %26 = vector.load %arg5[%c2, %c0_9] : memref<64x128xf32, #tpu.memory_space<vmem>>, vector<1x128xf32>
    tpu.vector_store %arg5[%c2, %c0_9], %25 {strides = array<i32>} : memref<64x128xf32, #tpu.memory_space<vmem>>, vector<1x128xf32>,
    %c3_i32 = arith.constant 3 : i32
    %27 = arith.addi %0, %c3_i32 : i32
    %28 = arith.index_cast %27 : i32 to index
    %29 = memref.load %arg1[%28] : memref<64xi32, #tpu.memory_space<smem>>
    %30 = arith.index_cast %29 : i32 to index
    %c0_10 = arith.constant 0 : index
    %31 = vector.load %arg3[%30, %c0_10] : memref<56x128xf32, #tpu.memory_space<vmem>>, vector<1x128xf32>
    %c3 = arith.constant 3 : index
    %c0_11 = arith.constant 0 : index
    %32 = vector.load %arg5[%c3, %c0_11] : memref<64x128xf32, #tpu.memory_space<vmem>>, vector<1x128xf32>
    tpu.vector_store %arg5[%c3, %c0_11], %31 {strides = array<i32>} : memref<64x128xf32, #tpu.memory_space<vmem>>, vector<1x128xf32>,
    %c4_i32 = arith.constant 4 : i32
    %33 = arith.addi %0, %c4_i32 : i32
    %34 = arith.index_cast %33 : i32 to index
    %35 = memref.load %arg1[%34] : memref<64xi32, #tpu.memory_space<smem>>
    %36 = arith.index_cast %35 : i32 to index
    %c0_12 = arith.constant 0 : index
    %37 = vector.load %arg3[%36, %c0_12] : memref<56x128xf32, #tpu.memory_space<vmem>>, vector<1x128xf32>
    %c4 = arith.constant 4 : index
    %c0_13 = arith.constant 0 : index
    %38 = vector.load %arg5[%c4, %c0_13] : memref<64x128xf32, #tpu.memory_space<vmem>>, vector<1x128xf32>
    tpu.vector_store %arg5[%c4, %c0_13], %37 {strides = array<i32>} : memref<64x128xf32, #tpu.memory_space<vmem>>, vector<1x128xf32>,
    %c5_i32 = arith.constant 5 : i32
    %39 = arith.addi %0, %c5_i32 : i32
    %40 = arith.index_cast %39 : i32 to index
    %41 = memref.load %arg1[%40] : memref<64xi32, #tpu.memory_space<smem>>
    %42 = arith.index_cast %41 : i32 to index
    %c0_14 = arith.constant 0 : index
    %43 = vector.load %arg3[%42, %c0_14] : memref<56x128xf32, #tpu.memory_space<vmem>>, vector<1x128xf32>
    %c5 = arith.constant 5 : index
    %c0_15 = arith.constant 0 : index
    %44 = vector.load %arg5[%c5, %c0_15] : memref<64x128xf32, #tpu.memory_space<vmem>>, vector<1x128xf32>
    tpu.vector_store %arg5[%c5, %c0_15], %43 {strides = array<i32>} : memref<64x128xf32, #tpu.memory_space<vmem>>, vector<1x128xf32>,
    %c6_i32 = arith.constant 6 : i32
    %45 = arith.addi %0, %c6_i32 : i32
    %46 = arith.index_cast %45 : i32 to index
    %47 = memref.load %arg1[%46] : memref<64xi32, #tpu.memory_space<smem>>
    %48 = arith.index_cast %47 : i32 to index
    %c0_16 = arith.constant 0 : index
    %49 = vector.load %arg3[%48, %c0_16] : memref<56x128xf32, #tpu.memory_space<vmem>>, vector<1x128xf32>
    %c6 = arith.constant 6 : index
    %c0_17 = arith.constant 0 : index
    %50 = vector.load %arg5[%c6, %c0_17] : memref<64x128xf32, #tpu.memory_space<vmem>>, vector<1x128xf32>
    tpu.vector_store %arg5[%c6, %c0_17], %49 {strides = array<i32>} : memref<64x128xf32, #tpu.memory_space<vmem>>, vector<1x128xf32>,
    %c7_i32 = arith.constant 7 : i32
    %51 = arith.addi %0, %c7_i32 : i32
    %52 = arith.index_cast %51 : i32 to index
    %53 = memref.load %arg1[%52] : memref<64xi32, #tpu.memory_space<smem>>
    %54 = arith.index_cast %53 : i32 to index
    %c0_18 = arith.constant 0 : index
    %55 = vector.load %arg3[%54, %c0_18] : memref<56x128xf32, #tpu.memory_space<vmem>>, vector<1x128xf32>
    %c7 = arith.constant 7 : index
    %c0_19 = arith.constant 0 : index
    %56 = vector.load %arg5[%c7, %c0_19] : memref<64x128xf32, #tpu.memory_space<vmem>>, vector<1x128xf32>
    tpu.vector_store %arg5[%c7, %c0_19], %55 {strides = array<i32>} : memref<64x128xf32, #tpu.memory_space<vmem>>, vector<1x128xf32>,
    %c8_i32 = arith.constant 8 : i32
    %57 = arith.addi %0, %c8_i32 : i32
    %58 = arith.index_cast %57 : i32 to index
    %59 = memref.load %arg1[%58] : memref<64xi32, #tpu.memory_space<smem>>
    %60 = arith.index_cast %59 : i32 to index
    %c0_20 = arith.constant 0 : index
    %61 = vector.load %arg3[%60, %c0_20] : memref<56x128xf32, #tpu.memory_space<vmem>>, vector<1x128xf32>
    %c8 = arith.constant 8 : index
    %c0_21 = arith.constant 0 : index
    %62 = vector.load %arg5[%c8, %c0_21] : memref<64x128xf32, #tpu.memory_space<vmem>>, vector<1x128xf32>
    tpu.vector_store %arg5[%c8, %c0_21], %61 {strides = array<i32>} : memref<64x128xf32, #tpu.memory_space<vmem>>, vector<1x128xf32>,
    %c9_i32 = arith.constant 9 : i32
    %63 = arith.addi %0, %c9_i32 : i32
    %64 = arith.index_cast %63 : i32 to index
    %65 = memref.load %arg1[%64] : memref<64xi32, #tpu.memory_space<smem>>
    %66 = arith.index_cast %65 : i32 to index
    %c0_22 = arith.constant 0 : index
    %67 = vector.load %arg3[%66, %c0_22] : memref<56x128xf32, #tpu.memory_space<vmem>>, vector<1x128xf32>
    %c9 = arith.constant 9 : index
    %c0_23 = arith.constant 0 : index
    %68 = vector.load %arg5[%c9, %c0_23] : memref<64x128xf32, #tpu.memory_space<vmem>>, vector<1x128xf32>
    tpu.vector_store %arg5[%c9, %c0_23], %67 {strides = array<i32>} : memref<64x128xf32, #tpu.memory_space<vmem>>, vector<1x128xf32>,
    %c10_i32 = arith.constant 10 : i32
    %69 = arith.addi %0, %c10_i32 : i32
    %70 = arith.index_cast %69 : i32 to index
    %71 = memref.load %arg1[%70] : memref<64xi32, #tpu.memory_space<smem>>
    %72 = arith.index_cast %71 : i32 to index
    %c0_24 = arith.constant 0 : index
    %73 = vector.load %arg3[%72, %c0_24] : memref<56x128xf32, #tpu.memory_space<vmem>>, vector<1x128xf32>
    %c10 = arith.constant 10 : index
    %c0_25 = arith.constant 0 : index
    %74 = vector.load %arg5[%c10, %c0_25] : memref<64x128xf32, #tpu.memory_space<vmem>>, vector<1x128xf32>
    tpu.vector_store %arg5[%c10, %c0_25], %73 {strides = array<i32>} : memref<64x128xf32, #tpu.memory_space<vmem>>, vector<1x128xf32>,
    %c11_i32 = arith.constant 11 : i32
    %75 = arith.addi %0, %c11_i32 : i32
    %76 = arith.index_cast %75 : i32 to index
    %77 = memref.load %arg1[%76] : memref<64xi32, #tpu.memory_space<smem>>
    %78 = arith.index_cast %77 : i32 to index
    %c0_26 = arith.constant 0 : index
    %79 = vector.load %arg3[%78, %c0_26] : memref<56x128xf32, #tpu.memory_space<vmem>>, vector<1x128xf32>
    %c11 = arith.constant 11 : index
    %c0_27 = arith.constant 0 : index
    %80 = vector.load %arg5[%c11, %c0_27] : memref<64x128xf32, #tpu.memory_space<vmem>>, vector<1x128xf32>
    tpu.vector_store %arg5[%c11, %c0_27], %79 {strides = array<i32>} : memref<64x128xf32, #tpu.memory_space<vmem>>, vector<1x128xf32>,
    %c12_i32 = arith.constant 12 : i32
    %81 = arith.addi %0, %c12_i32 : i32
    %82 = arith.index_cast %81 : i32 to index
    %83 = memref.load %arg1[%82] : memref<64xi32, #tpu.memory_space<smem>>
    %84 = arith.index_cast %83 : i32 to index
    %c0_28 = arith.constant 0 : index
    %85 = vector.load %arg3[%84, %c0_28] : memref<56x128xf32, #tpu.memory_space<vmem>>, vector<1x128xf32>
    %c12 = arith.constant 12 : index
    %c0_29 = arith.constant 0 : index
    %86 = vector.load %arg5[%c12, %c0_29] : memref<64x128xf32, #tpu.memory_space<vmem>>, vector<1x128xf32>
    tpu.vector_store %arg5[%c12, %c0_29], %85 {strides = array<i32>} : memref<64x128xf32, #tpu.memory_space<vmem>>, vector<1x128xf32>,
    %c13_i32 = arith.constant 13 : i32
    %87 = arith.addi %0, %c13_i32 : i32
    %88 = arith.index_cast %87 : i32 to index
    %89 = memref.load %arg1[%88] : memref<64xi32, #tpu.memory_space<smem>>
    %90 = arith.index_cast %89 : i32 to index
    %c0_30 = arith.constant 0 : index
    %91 = vector.load %arg3[%90, %c0_30] : memref<56x128xf32, #tpu.memory_space<vmem>>, vector<1x128xf32>
    %c13 = arith.constant 13 : index
    %c0_31 = arith.constant 0 : index
    %92 = vector.load %arg5[%c13, %c0_31] : memref<64x128xf32, #tpu.memory_space<vmem>>, vector<1x128xf32>
    tpu.vector_store %arg5[%c13, %c0_31], %91 {strides = array<i32>} : memref<64x128xf32, #tpu.memory_space<vmem>>, vector<1x128xf32>,
    %c14_i32 = arith.constant 14 : i32
    %93 = arith.addi %0, %c14_i32 : i32
    %94 = arith.index_cast %93 : i32 to index
    %95 = memref.load %arg1[%94] : memref<64xi32, #tpu.memory_space<smem>>
    %96 = arith.index_cast %95 : i32 to index
    %c0_32 = arith.constant 0 : index
    %97 = vector.load %arg3[%96, %c0_32] : memref<56x128xf32, #tpu.memory_space<vmem>>, vector<1x128xf32>
    %c14 = arith.constant 14 : index
    %c0_33 = arith.constant 0 : index
    %98 = vector.load %arg5[%c14, %c0_33] : memref<64x128xf32, #tpu.memory_space<vmem>>, vector<1x128xf32>
    tpu.vector_store %arg5[%c14, %c0_33], %97 {strides = array<i32>} : memref<64x128xf32, #tpu.memory_space<vmem>>, vector<1x128xf32>,
    %c15_i32 = arith.constant 15 : i32
    %99 = arith.addi %0, %c15_i32 : i32
    %100 = arith.index_cast %99 : i32 to index
    %101 = memref.load %arg1[%100] : memref<64xi32, #tpu.memory_space<smem>>
    %102 = arith.index_cast %101 : i32 to index
    %c0_34 = arith.constant 0 : index
    %103 = vector.load %arg3[%102, %c0_34] : memref<56x128xf32, #tpu.memory_space<vmem>>, vector<1x128xf32>
    %c15 = arith.constant 15 : index
    %c0_35 = arith.constant 0 : index
    %104 = vector.load %arg5[%c15, %c0_35] : memref<64x128xf32, #tpu.memory_space<vmem>>, vector<1x128xf32>
    tpu.vector_store %arg5[%c15, %c0_35], %103 {strides = array<i32>} : memref<64x128xf32, #tpu.memory_space<vmem>>, vector<1x128xf32>,
    %c16_i32 = arith.constant 16 : i32
    %105 = arith.addi %0, %c16_i32 : i32
    %106 = arith.index_cast %105 : i32 to index
    %107 = memref.load %arg1[%106] : memref<64xi32, #tpu.memory_space<smem>>
    %108 = arith.index_cast %107 : i32 to index
    %c0_36 = arith.constant 0 : index
    %109 = vector.load %arg3[%108, %c0_36] : memref<56x128xf32, #tpu.memory_space<vmem>>, vector<1x128xf32>
    %c16 = arith.constant 16 : index
    %c0_37 = arith.constant 0 : index
    %110 = vector.load %arg5[%c16, %c0_37] : memref<64x128xf32, #tpu.memory_space<vmem>>, vector<1x128xf32>
    tpu.vector_store %arg5[%c16, %c0_37], %109 {strides = array<i32>} : memref<64x128xf32, #tpu.memory_space<vmem>>, vector<1x128xf32>,
    %c17_i32 = arith.constant 17 : i32
    %111 = arith.addi %0, %c17_i32 : i32
    %112 = arith.index_cast %111 : i32 to index
    %113 = memref.load %arg1[%112] : memref<64xi32, #tpu.memory_space<smem>>
    %114 = arith.index_cast %113 : i32 to index
    %c0_38 = arith.constant 0 : index
    %115 = vector.load %arg3[%114, %c0_38] : memref<56x128xf32, #tpu.memory_space<vmem>>, vector<1x128xf32>
    %c17 = arith.constant 17 : index
    %c0_39 = arith.constant 0 : index
    %116 = vector.load %arg5[%c17, %c0_39] : memref<64x128xf32, #tpu.memory_space<vmem>>, vector<1x128xf32>
    tpu.vector_store %arg5[%c17, %c0_39], %115 {strides = array<i32>} : memref<64x128xf32, #tpu.memory_space<vmem>>, vector<1x128xf32>,
    %c18_i32 = arith.constant 18 : i32
    %117 = arith.addi %0, %c18_i32 : i32
    %118 = arith.index_cast %117 : i32 to index
    %119 = memref.load %arg1[%118] : memref<64xi32, #tpu.memory_space<smem>>
    %120 = arith.index_cast %119 : i32 to index
    %c0_40 = arith.constant 0 : index
    %121 = vector.load %arg3[%120, %c0_40] : memref<56x128xf32, #tpu.memory_space<vmem>>, vector<1x128xf32>
    %c18 = arith.constant 18 : index
    %c0_41 = arith.constant 0 : index
    %122 = vector.load %arg5[%c18, %c0_41] : memref<64x128xf32, #tpu.memory_space<vmem>>, vector<1x128xf32>
    tpu.vector_store %arg5[%c18, %c0_41], %121 {strides = array<i32>} : memref<64x128xf32, #tpu.memory_space<vmem>>, vector<1x128xf32>,
    %c19_i32 = arith.constant 19 : i32
    %123 = arith.addi %0, %c19_i32 : i32
    %124 = arith.index_cast %123 : i32 to index
    %125 = memref.load %arg1[%124] : memref<64xi32, #tpu.memory_space<smem>>
    %126 = arith.index_cast %125 : i32 to index
    %c0_42 = arith.constant 0 : index
    %127 = vector.load %arg3[%126, %c0_42] : memref<56x128xf32, #tpu.memory_space<vmem>>, vector<1x128xf32>
    %c19 = arith.constant 19 : index
    %c0_43 = arith.constant 0 : index
    %128 = vector.load %arg5[%c19, %c0_43] : memref<64x128xf32, #tpu.memory_space<vmem>>, vector<1x128xf32>
    tpu.vector_store %arg5[%c19, %c0_43], %127 {strides = array<i32>} : memref<64x128xf32, #tpu.memory_space<vmem>>, vector<1x128xf32>,
    %c20_i32 = arith.constant 20 : i32
    %129 = arith.addi %0, %c20_i32 : i32
    %130 = arith.index_cast %129 : i32 to index
    %131 = memref.load %arg1[%130] : memref<64xi32, #tpu.memory_space<smem>>
    %132 = arith.index_cast %131 : i32 to index
    %c0_44 = arith.constant 0 : index
    %133 = vector.load %arg3[%132, %c0_44] : memref<56x128xf32, #tpu.memory_space<vmem>>, vector<1x128xf32>
    %c20 = arith.constant 20 : index
    %c0_45 = arith.constant 0 : index
    %134 = vector.load %arg5[%c20, %c0_45] : memref<64x128xf32, #tpu.memory_space<vmem>>, vector<1x128xf32>
    tpu.vector_store %arg5[%c20, %c0_45], %133 {strides = array<i32>} : memref<64x128xf32, #tpu.memory_space<vmem>>, vector<1x128xf32>,
    %c21_i32 = arith.constant 21 : i32
    %135 = arith.addi %0, %c21_i32 : i32
    %136 = arith.index_cast %135 : i32 to index
    %137 = memref.load %arg1[%136] : memref<64xi32, #tpu.memory_space<smem>>
    %138 = arith.index_cast %137 : i32 to index
    %c0_46 = arith.constant 0 : index
    %139 = vector.load %arg3[%138, %c0_46] : memref<56x128xf32, #tpu.memory_space<vmem>>, vector<1x128xf32>
    %c21 = arith.constant 21 : index
    %c0_47 = arith.constant 0 : index
    %140 = vector.load %arg5[%c21, %c0_47] : memref<64x128xf32, #tpu.memory_space<vmem>>, vector<1x128xf32>
    tpu.vector_store %arg5[%c21, %c0_47], %139 {strides = array<i32>} : memref<64x128xf32, #tpu.memory_space<vmem>>, vector<1x128xf32>,
    %c22_i32 = arith.constant 22 : i32
    %141 = arith.addi %0, %c22_i32 : i32
    %142 = arith.index_cast %141 : i32 to index
    %143 = memref.load %arg1[%142] : memref<64xi32, #tpu.memory_space<smem>>
    %144 = arith.index_cast %143 : i32 to index
    %c0_48 = arith.constant 0 : index
    %145 = vector.load %arg3[%144, %c0_48] : memref<56x128xf32, #tpu.memory_space<vmem>>, vector<1x128xf32>
    %c22 = arith.constant 22 : index
    %c0_49 = arith.constant 0 : index
    %146 = vector.load %arg5[%c22, %c0_49] : memref<64x128xf32, #tpu.memory_space<vmem>>, vector<1x128xf32>
    tpu.vector_store %arg5[%c22, %c0_49], %145 {strides = array<i32>} : memref<64x128xf32, #tpu.memory_space<vmem>>, vector<1x128xf32>,
    %c23_i32 = arith.constant 23 : i32
    %147 = arith.addi %0, %c23_i32 : i32
    %148 = arith.index_cast %147 : i32 to index
    %149 = memref.load %arg1[%148] : memref<64xi32, #tpu.memory_space<smem>>
    %150 = arith.index_cast %149 : i32 to index
    %c0_50 = arith.constant 0 : index
    %151 = vector.load %arg3[%150, %c0_50] : memref<56x128xf32, #tpu.memory_space<vmem>>, vector<1x128xf32>
    %c23 = arith.constant 23 : index
    %c0_51 = arith.constant 0 : index
    %152 = vector.load %arg5[%c23, %c0_51] : memref<64x128xf32, #tpu.memory_space<vmem>>, vector<1x128xf32>
    tpu.vector_store %arg5[%c23, %c0_51], %151 {strides = array<i32>} : memref<64x128xf32, #tpu.memory_space<vmem>>, vector<1x128xf32>,
    %c24_i32 = arith.constant 24 : i32
    %153 = arith.addi %0, %c24_i32 : i32
    %154 = arith.index_cast %153 : i32 to index
    %155 = memref.load %arg1[%154] : memref<64xi32, #tpu.memory_space<smem>>
    %156 = arith.index_cast %155 : i32 to index
    %c0_52 = arith.constant 0 : index
    %157 = vector.load %arg3[%156, %c0_52] : memref<56x128xf32, #tpu.memory_space<vmem>>, vector<1x128xf32>
    %c24 = arith.constant 24 : index
    %c0_53 = arith.constant 0 : index
    %158 = vector.load %arg5[%c24, %c0_53] : memref<64x128xf32, #tpu.memory_space<vmem>>, vector<1x128xf32>
    tpu.vector_store %arg5[%c24, %c0_53], %157 {strides = array<i32>} : memref<64x128xf32, #tpu.memory_space<vmem>>, vector<1x128xf32>,
    %c25_i32 = arith.constant 25 : i32
    %159 = arith.addi %0, %c25_i32 : i32
    %160 = arith.index_cast %159 : i32 to index
    %161 = memref.load %arg1[%160] : memref<64xi32, #tpu.memory_space<smem>>
    %162 = arith.index_cast %161 : i32 to index
    %c0_54 = arith.constant 0 : index
    %163 = vector.load %arg3[%162, %c0_54] : memref<56x128xf32, #tpu.memory_space<vmem>>, vector<1x128xf32>
    %c25 = arith.constant 25 : index
    %c0_55 = arith.constant 0 : index
    %164 = vector.load %arg5[%c25, %c0_55] : memref<64x128xf32, #tpu.memory_space<vmem>>, vector<1x128xf32>
    tpu.vector_store %arg5[%c25, %c0_55], %163 {strides = array<i32>} : memref<64x128xf32, #tpu.memory_space<vmem>>, vector<1x128xf32>,
    %c26_i32 = arith.constant 26 : i32
    %165 = arith.addi %0, %c26_i32 : i32
    %166 = arith.index_cast %165 : i32 to index
    %167 = memref.load %arg1[%166] : memref<64xi32, #tpu.memory_space<smem>>
    %168 = arith.index_cast %167 : i32 to index
    %c0_56 = arith.constant 0 : index
    %169 = vector.load %arg3[%168, %c0_56] : memref<56x128xf32, #tpu.memory_space<vmem>>, vector<1x128xf32>
    %c26 = arith.constant 26 : index
    %c0_57 = arith.constant 0 : index
    %170 = vector.load %arg5[%c26, %c0_57] : memref<64x128xf32, #tpu.memory_space<vmem>>, vector<1x128xf32>
    tpu.vector_store %arg5[%c26, %c0_57], %169 {strides = array<i32>} : memref<64x128xf32, #tpu.memory_space<vmem>>, vector<1x128xf32>,
    %c27_i32 = arith.constant 27 : i32
    %171 = arith.addi %0, %c27_i32 : i32
    %172 = arith.index_cast %171 : i32 to index
    %173 = memref.load %arg1[%172] : memref<64xi32, #tpu.memory_space<smem>>
    %174 = arith.index_cast %173 : i32 to index
    %c0_58 = arith.constant 0 : index
    %175 = vector.load %arg3[%174, %c0_58] : memref<56x128xf32, #tpu.memory_space<vmem>>, vector<1x128xf32>
    %c27 = arith.constant 27 : index
    %c0_59 = arith.constant 0 : index
    %176 = vector.load %arg5[%c27, %c0_59] : memref<64x128xf32, #tpu.memory_space<vmem>>, vector<1x128xf32>
    tpu.vector_store %arg5[%c27, %c0_59], %175 {strides = array<i32>} : memref<64x128xf32, #tpu.memory_space<vmem>>, vector<1x128xf32>,
    %c28_i32 = arith.constant 28 : i32
    %177 = arith.addi %0, %c28_i32 : i32
    %178 = arith.index_cast %177 : i32 to index
    %179 = memref.load %arg1[%178] : memref<64xi32, #tpu.memory_space<smem>>
    %180 = arith.index_cast %179 : i32 to index
    %c0_60 = arith.constant 0 : index
    %181 = vector.load %arg3[%180, %c0_60] : memref<56x128xf32, #tpu.memory_space<vmem>>, vector<1x128xf32>
    %c28 = arith.constant 28 : index
    %c0_61 = arith.constant 0 : index
    %182 = vector.load %arg5[%c28, %c0_61] : memref<64x128xf32, #tpu.memory_space<vmem>>, vector<1x128xf32>
    tpu.vector_store %arg5[%c28, %c0_61], %181 {strides = array<i32>} : memref<64x128xf32, #tpu.memory_space<vmem>>, vector<1x128xf32>,
    %c29_i32 = arith.constant 29 : i32
    %183 = arith.addi %0, %c29_i32 : i32
    %184 = arith.index_cast %183 : i32 to index
    %185 = memref.load %arg1[%184] : memref<64xi32, #tpu.memory_space<smem>>
    %186 = arith.index_cast %185 : i32 to index
    %c0_62 = arith.constant 0 : index
    %187 = vector.load %arg3[%186, %c0_62] : memref<56x128xf32, #tpu.memory_space<vmem>>, vector<1x128xf32>
    %c29 = arith.constant 29 : index
    %c0_63 = arith.constant 0 : index
    %188 = vector.load %arg5[%c29, %c0_63] : memref<64x128xf32, #tpu.memory_space<vmem>>, vector<1x128xf32>
    tpu.vector_store %arg5[%c29, %c0_63], %187 {strides = array<i32>} : memref<64x128xf32, #tpu.memory_space<vmem>>, vector<1x128xf32>,
    %c30_i32 = arith.constant 30 : i32
    %189 = arith.addi %0, %c30_i32 : i32
    %190 = arith.index_cast %189 : i32 to index
    %191 = memref.load %arg1[%190] : memref<64xi32, #tpu.memory_space<smem>>
    %192 = arith.index_cast %191 : i32 to index
    %c0_64 = arith.constant 0 : index
    %193 = vector.load %arg3[%192, %c0_64] : memref<56x128xf32, #tpu.memory_space<vmem>>, vector<1x128xf32>
    %c30 = arith.constant 30 : index
    %c0_65 = arith.constant 0 : index
    %194 = vector.load %arg5[%c30, %c0_65] : memref<64x128xf32, #tpu.memory_space<vmem>>, vector<1x128xf32>
    tpu.vector_store %arg5[%c30, %c0_65], %193 {strides = array<i32>} : memref<64x128xf32, #tpu.memory_space<vmem>>, vector<1x128xf32>,
    %c31_i32 = arith.constant 31 : i32
    %195 = arith.addi %0, %c31_i32 : i32
    %196 = arith.index_cast %195 : i32 to index
    %197 = memref.load %arg1[%196] : memref<64xi32, #tpu.memory_space<smem>>
    %198 = arith.index_cast %197 : i32 to index
    %c0_66 = arith.constant 0 : index
    %199 = vector.load %arg3[%198, %c0_66] : memref<56x128xf32, #tpu.memory_space<vmem>>, vector<1x128xf32>
    %c31 = arith.constant 31 : index
    %c0_67 = arith.constant 0 : index
    %200 = vector.load %arg5[%c31, %c0_67] : memref<64x128xf32, #tpu.memory_space<vmem>>, vector<1x128xf32>
    tpu.vector_store %arg5[%c31, %c0_67], %199 {strides = array<i32>} : memref<64x128xf32, #tpu.memory_space<vmem>>, vector<1x128xf32>,
    %c32_i32 = arith.constant 32 : i32
    %201 = arith.addi %0, %c32_i32 : i32
    %202 = arith.index_cast %201 : i32 to index
    %203 = memref.load %arg1[%202] : memref<64xi32, #tpu.memory_space<smem>>
    %204 = arith.index_cast %203 : i32 to index
    %c0_68 = arith.constant 0 : index
    %205 = vector.load %arg3[%204, %c0_68] : memref<56x128xf32, #tpu.memory_space<vmem>>, vector<1x128xf32>
    %c32 = arith.constant 32 : index
    %c0_69 = arith.constant 0 : index
    %206 = vector.load %arg5[%c32, %c0_69] : memref<64x128xf32, #tpu.memory_space<vmem>>, vector<1x128xf32>
    tpu.vector_store %arg5[%c32, %c0_69], %205 {strides = array<i32>} : memref<64x128xf32, #tpu.memory_space<vmem>>, vector<1x128xf32>,
    %c33_i32 = arith.constant 33 : i32
    %207 = arith.addi %0, %c33_i32 : i32
    %208 = arith.index_cast %207 : i32 to index
    %209 = memref.load %arg1[%208] : memref<64xi32, #tpu.memory_space<smem>>
    %210 = arith.index_cast %209 : i32 to index
    %c0_70 = arith.constant 0 : index
    %211 = vector.load %arg3[%210, %c0_70] : memref<56x128xf32, #tpu.memory_space<vmem>>, vector<1x128xf32>
    %c33 = arith.constant 33 : index
    %c0_71 = arith.constant 0 : index
    %212 = vector.load %arg5[%c33, %c0_71] : memref<64x128xf32, #tpu.memory_space<vmem>>, vector<1x128xf32>
    tpu.vector_store %arg5[%c33, %c0_71], %211 {strides = array<i32>} : memref<64x128xf32, #tpu.memory_space<vmem>>, vector<1x128xf32>,
    %c34_i32 = arith.constant 34 : i32
    %213 = arith.addi %0, %c34_i32 : i32
    %214 = arith.index_cast %213 : i32 to index
    %215 = memref.load %arg1[%214] : memref<64xi32, #tpu.memory_space<smem>>
    %216 = arith.index_cast %215 : i32 to index
    %c0_72 = arith.constant 0 : index
    %217 = vector.load %arg3[%216, %c0_72] : memref<56x128xf32, #tpu.memory_space<vmem>>, vector<1x128xf32>
    %c34 = arith.constant 34 : index
    %c0_73 = arith.constant 0 : index
    %218 = vector.load %arg5[%c34, %c0_73] : memref<64x128xf32, #tpu.memory_space<vmem>>, vector<1x128xf32>
    tpu.vector_store %arg5[%c34, %c0_73], %217 {strides = array<i32>} : memref<64x128xf32, #tpu.memory_space<vmem>>, vector<1x128xf32>,
    %c35_i32 = arith.constant 35 : i32
    %219 = arith.addi %0, %c35_i32 : i32
    %220 = arith.index_cast %219 : i32 to index
    %221 = memref.load %arg1[%220] : memref<64xi32, #tpu.memory_space<smem>>
    %222 = arith.index_cast %221 : i32 to index
    %c0_74 = arith.constant 0 : index
    %223 = vector.load %arg3[%222, %c0_74] : memref<56x128xf32, #tpu.memory_space<vmem>>, vector<1x128xf32>
    %c35 = arith.constant 35 : index
    %c0_75 = arith.constant 0 : index
    %224 = vector.load %arg5[%c35, %c0_75] : memref<64x128xf32, #tpu.memory_space<vmem>>, vector<1x128xf32>
    tpu.vector_store %arg5[%c35, %c0_75], %223 {strides = array<i32>} : memref<64x128xf32, #tpu.memory_space<vmem>>, vector<1x128xf32>,
    %c36_i32 = arith.constant 36 : i32
    %225 = arith.addi %0, %c36_i32 : i32
    %226 = arith.index_cast %225 : i32 to index
    %227 = memref.load %arg1[%226] : memref<64xi32, #tpu.memory_space<smem>>
    %228 = arith.index_cast %227 : i32 to index
    %c0_76 = arith.constant 0 : index
    %229 = vector.load %arg3[%228, %c0_76] : memref<56x128xf32, #tpu.memory_space<vmem>>, vector<1x128xf32>
    %c36 = arith.constant 36 : index
    %c0_77 = arith.constant 0 : index
    %230 = vector.load %arg5[%c36, %c0_77] : memref<64x128xf32, #tpu.memory_space<vmem>>, vector<1x128xf32>
    tpu.vector_store %arg5[%c36, %c0_77], %229 {strides = array<i32>} : memref<64x128xf32, #tpu.memory_space<vmem>>, vector<1x128xf32>,
    %c37_i32 = arith.constant 37 : i32
    %231 = arith.addi %0, %c37_i32 : i32
    %232 = arith.index_cast %231 : i32 to index
    %233 = memref.load %arg1[%232] : memref<64xi32, #tpu.memory_space<smem>>
    %234 = arith.index_cast %233 : i32 to index
    %c0_78 = arith.constant 0 : index
    %235 = vector.load %arg3[%234, %c0_78] : memref<56x128xf32, #tpu.memory_space<vmem>>, vector<1x128xf32>
    %c37 = arith.constant 37 : index
    %c0_79 = arith.constant 0 : index
    %236 = vector.load %arg5[%c37, %c0_79] : memref<64x128xf32, #tpu.memory_space<vmem>>, vector<1x128xf32>
    tpu.vector_store %arg5[%c37, %c0_79], %235 {strides = array<i32>} : memref<64x128xf32, #tpu.memory_space<vmem>>, vector<1x128xf32>,
    %c38_i32 = arith.constant 38 : i32
    %237 = arith.addi %0, %c38_i32 : i32
    %238 = arith.index_cast %237 : i32 to index
    %239 = memref.load %arg1[%238] : memref<64xi32, #tpu.memory_space<smem>>
    %240 = arith.index_cast %239 : i32 to index
    %c0_80 = arith.constant 0 : index
    %241 = vector.load %arg3[%240, %c0_80] : memref<56x128xf32, #tpu.memory_space<vmem>>, vector<1x128xf32>
    %c38 = arith.constant 38 : index
    %c0_81 = arith.constant 0 : index
    %242 = vector.load %arg5[%c38, %c0_81] : memref<64x128xf32, #tpu.memory_space<vmem>>, vector<1x128xf32>
    tpu.vector_store %arg5[%c38, %c0_81], %241 {strides = array<i32>} : memref<64x128xf32, #tpu.memory_space<vmem>>, vector<1x128xf32>,
    %c39_i32 = arith.constant 39 : i32
    %243 = arith.addi %0, %c39_i32 : i32
    %244 = arith.index_cast %243 : i32 to index
    %245 = memref.load %arg1[%244] : memref<64xi32, #tpu.memory_space<smem>>
    %246 = arith.index_cast %245 : i32 to index
    %c0_82 = arith.constant 0 : index
    %247 = vector.load %arg3[%246, %c0_82] : memref<56x128xf32, #tpu.memory_space<vmem>>, vector<1x128xf32>
    %c39 = arith.constant 39 : index
    %c0_83 = arith.constant 0 : index
    %248 = vector.load %arg5[%c39, %c0_83] : memref<64x128xf32, #tpu.memory_space<vmem>>, vector<1x128xf32>
    tpu.vector_store %arg5[%c39, %c0_83], %247 {strides = array<i32>} : memref<64x128xf32, #tpu.memory_space<vmem>>, vector<1x128xf32>,
    %c40_i32 = arith.constant 40 : i32
    %249 = arith.addi %0, %c40_i32 : i32
    %250 = arith.index_cast %249 : i32 to index
    %251 = memref.load %arg1[%250] : memref<64xi32, #tpu.memory_space<smem>>
    %252 = arith.index_cast %251 : i32 to index
    %c0_84 = arith.constant 0 : index
    %253 = vector.load %arg3[%252, %c0_84] : memref<56x128xf32, #tpu.memory_space<vmem>>, vector<1x128xf32>
    %c40 = arith.constant 40 : index
    %c0_85 = arith.constant 0 : index
    %254 = vector.load %arg5[%c40, %c0_85] : memref<64x128xf32, #tpu.memory_space<vmem>>, vector<1x128xf32>
    tpu.vector_store %arg5[%c40, %c0_85], %253 {strides = array<i32>} : memref<64x128xf32, #tpu.memory_space<vmem>>, vector<1x128xf32>,
    %c41_i32 = arith.constant 41 : i32
    %255 = arith.addi %0, %c41_i32 : i32
    %256 = arith.index_cast %255 : i32 to index
    %257 = memref.load %arg1[%256] : memref<64xi32, #tpu.memory_space<smem>>
    %258 = arith.index_cast %257 : i32 to index
    %c0_86 = arith.constant 0 : index
    %259 = vector.load %arg3[%258, %c0_86] : memref<56x128xf32, #tpu.memory_space<vmem>>, vector<1x128xf32>
    %c41 = arith.constant 41 : index
    %c0_87 = arith.constant 0 : index
    %260 = vector.load %arg5[%c41, %c0_87] : memref<64x128xf32, #tpu.memory_space<vmem>>, vector<1x128xf32>
    tpu.vector_store %arg5[%c41, %c0_87], %259 {strides = array<i32>} : memref<64x128xf32, #tpu.memory_space<vmem>>, vector<1x128xf32>,
    %c42_i32 = arith.constant 42 : i32
    %261 = arith.addi %0, %c42_i32 : i32
    %262 = arith.index_cast %261 : i32 to index
    %263 = memref.load %arg1[%262] : memref<64xi32, #tpu.memory_space<smem>>
    %264 = arith.index_cast %263 : i32 to index
    %c0_88 = arith.constant 0 : index
    %265 = vector.load %arg3[%264, %c0_88] : memref<56x128xf32, #tpu.memory_space<vmem>>, vector<1x128xf32>
    %c42 = arith.constant 42 : index
    %c0_89 = arith.constant 0 : index
    %266 = vector.load %arg5[%c42, %c0_89] : memref<64x128xf32, #tpu.memory_space<vmem>>, vector<1x128xf32>
    tpu.vector_store %arg5[%c42, %c0_89], %265 {strides = array<i32>} : memref<64x128xf32, #tpu.memory_space<vmem>>, vector<1x128xf32>,
    %c43_i32 = arith.constant 43 : i32
    %267 = arith.addi %0, %c43_i32 : i32
    %268 = arith.index_cast %267 : i32 to index
    %269 = memref.load %arg1[%268] : memref<64xi32, #tpu.memory_space<smem>>
    %270 = arith.index_cast %269 : i32 to index
    %c0_90 = arith.constant 0 : index
    %271 = vector.load %arg3[%270, %c0_90] : memref<56x128xf32, #tpu.memory_space<vmem>>, vector<1x128xf32>
    %c43 = arith.constant 43 : index
    %c0_91 = arith.constant 0 : index
    %272 = vector.load %arg5[%c43, %c0_91] : memref<64x128xf32, #tpu.memory_space<vmem>>, vector<1x128xf32>
    tpu.vector_store %arg5[%c43, %c0_91], %271 {strides = array<i32>} : memref<64x128xf32, #tpu.memory_space<vmem>>, vector<1x128xf32>,
    %c44_i32 = arith.constant 44 : i32
    %273 = arith.addi %0, %c44_i32 : i32
    %274 = arith.index_cast %273 : i32 to index
    %275 = memref.load %arg1[%274] : memref<64xi32, #tpu.memory_space<smem>>
    %276 = arith.index_cast %275 : i32 to index
    %c0_92 = arith.constant 0 : index
    %277 = vector.load %arg3[%276, %c0_92] : memref<56x128xf32, #tpu.memory_space<vmem>>, vector<1x128xf32>
    %c44 = arith.constant 44 : index
    %c0_93 = arith.constant 0 : index
    %278 = vector.load %arg5[%c44, %c0_93] : memref<64x128xf32, #tpu.memory_space<vmem>>, vector<1x128xf32>
    tpu.vector_store %arg5[%c44, %c0_93], %277 {strides = array<i32>} : memref<64x128xf32, #tpu.memory_space<vmem>>, vector<1x128xf32>,
    %c45_i32 = arith.constant 45 : i32
    %279 = arith.addi %0, %c45_i32 : i32
    %280 = arith.index_cast %279 : i32 to index
    %281 = memref.load %arg1[%280] : memref<64xi32, #tpu.memory_space<smem>>
    %282 = arith.index_cast %281 : i32 to index
    %c0_94 = arith.constant 0 : index
    %283 = vector.load %arg3[%282, %c0_94] : memref<56x128xf32, #tpu.memory_space<vmem>>, vector<1x128xf32>
    %c45 = arith.constant 45 : index
    %c0_95 = arith.constant 0 : index
    %284 = vector.load %arg5[%c45, %c0_95] : memref<64x128xf32, #tpu.memory_space<vmem>>, vector<1x128xf32>
    tpu.vector_store %arg5[%c45, %c0_95], %283 {strides = array<i32>} : memref<64x128xf32, #tpu.memory_space<vmem>>, vector<1x128xf32>,
    %c46_i32 = arith.constant 46 : i32
    %285 = arith.addi %0, %c46_i32 : i32
    %286 = arith.index_cast %285 : i32 to index
    %287 = memref.load %arg1[%286] : memref<64xi32, #tpu.memory_space<smem>>
    %288 = arith.index_cast %287 : i32 to index
    %c0_96 = arith.constant 0 : index
    %289 = vector.load %arg3[%288, %c0_96] : memref<56x128xf32, #tpu.memory_space<vmem>>, vector<1x128xf32>
    %c46 = arith.constant 46 : index
    %c0_97 = arith.constant 0 : index
    %290 = vector.load %arg5[%c46, %c0_97] : memref<64x128xf32, #tpu.memory_space<vmem>>, vector<1x128xf32>
    tpu.vector_store %arg5[%c46, %c0_97], %289 {strides = array<i32>} : memref<64x128xf32, #tpu.memory_space<vmem>>, vector<1x128xf32>,
    %c47_i32 = arith.constant 47 : i32
    %291 = arith.addi %0, %c47_i32 : i32
    %292 = arith.index_cast %291 : i32 to index
    %293 = memref.load %arg1[%292] : memref<64xi32, #tpu.memory_space<smem>>
    %294 = arith.index_cast %293 : i32 to index
    %c0_98 = arith.constant 0 : index
    %295 = vector.load %arg3[%294, %c0_98] : memref<56x128xf32, #tpu.memory_space<vmem>>, vector<1x128xf32>
    %c47 = arith.constant 47 : index
    %c0_99 = arith.constant 0 : index
    %296 = vector.load %arg5[%c47, %c0_99] : memref<64x128xf32, #tpu.memory_space<vmem>>, vector<1x128xf32>
    tpu.vector_store %arg5[%c47, %c0_99], %295 {strides = array<i32>} : memref<64x128xf32, #tpu.memory_space<vmem>>, vector<1x128xf32>,
    %c48_i32 = arith.constant 48 : i32
    %297 = arith.addi %0, %c48_i32 : i32
    %298 = arith.index_cast %297 : i32 to index
    %299 = memref.load %arg1[%298] : memref<64xi32, #tpu.memory_space<smem>>
    %300 = arith.index_cast %299 : i32 to index
    %c0_100 = arith.constant 0 : index
    %301 = vector.load %arg3[%300, %c0_100] : memref<56x128xf32, #tpu.memory_space<vmem>>, vector<1x128xf32>
    %c48 = arith.constant 48 : index
    %c0_101 = arith.constant 0 : index
    %302 = vector.load %arg5[%c48, %c0_101] : memref<64x128xf32, #tpu.memory_space<vmem>>, vector<1x128xf32>
    tpu.vector_store %arg5[%c48, %c0_101], %301 {strides = array<i32>} : memref<64x128xf32, #tpu.memory_space<vmem>>, vector<1x128xf32>,
    %c49_i32 = arith.constant 49 : i32
    %303 = arith.addi %0, %c49_i32 : i32
    %304 = arith.index_cast %303 : i32 to index
    %305 = memref.load %arg1[%304] : memref<64xi32, #tpu.memory_space<smem>>
    %306 = arith.index_cast %305 : i32 to index
    %c0_102 = arith.constant 0 : index
    %307 = vector.load %arg3[%306, %c0_102] : memref<56x128xf32, #tpu.memory_space<vmem>>, vector<1x128xf32>
    %c49 = arith.constant 49 : index
    %c0_103 = arith.constant 0 : index
    %308 = vector.load %arg5[%c49, %c0_103] : memref<64x128xf32, #tpu.memory_space<vmem>>, vector<1x128xf32>
    tpu.vector_store %arg5[%c49, %c0_103], %307 {strides = array<i32>} : memref<64x128xf32, #tpu.memory_space<vmem>>, vector<1x128xf32>,
    %c50_i32 = arith.constant 50 : i32
    %309 = arith.addi %0, %c50_i32 : i32
    %310 = arith.index_cast %309 : i32 to index
    %311 = memref.load %arg1[%310] : memref<64xi32, #tpu.memory_space<smem>>
    %312 = arith.index_cast %311 : i32 to index
    %c0_104 = arith.constant 0 : index
    %313 = vector.load %arg3[%312, %c0_104] : memref<56x128xf32, #tpu.memory_space<vmem>>, vector<1x128xf32>
    %c50 = arith.constant 50 : index
    %c0_105 = arith.constant 0 : index
    %314 = vector.load %arg5[%c50, %c0_105] : memref<64x128xf32, #tpu.memory_space<vmem>>, vector<1x128xf32>
    tpu.vector_store %arg5[%c50, %c0_105], %313 {strides = array<i32>} : memref<64x128xf32, #tpu.memory_space<vmem>>, vector<1x128xf32>,
    %c51_i32 = arith.constant 51 : i32
    %315 = arith.addi %0, %c51_i32 : i32
    %316 = arith.index_cast %315 : i32 to index
    %317 = memref.load %arg1[%316] : memref<64xi32, #tpu.memory_space<smem>>
    %318 = arith.index_cast %317 : i32 to index
    %c0_106 = arith.constant 0 : index
    %319 = vector.load %arg3[%318, %c0_106] : memref<56x128xf32, #tpu.memory_space<vmem>>, vector<1x128xf32>
    %c51 = arith.constant 51 : index
    %c0_107 = arith.constant 0 : index
    %320 = vector.load %arg5[%c51, %c0_107] : memref<64x128xf32, #tpu.memory_space<vmem>>, vector<1x128xf32>
    tpu.vector_store %arg5[%c51, %c0_107], %319 {strides = array<i32>} : memref<64x128xf32, #tpu.memory_space<vmem>>, vector<1x128xf32>,
    %c52_i32 = arith.constant 52 : i32
    %321 = arith.addi %0, %c52_i32 : i32
    %322 = arith.index_cast %321 : i32 to index
    %323 = memref.load %arg1[%322] : memref<64xi32, #tpu.memory_space<smem>>
    %324 = arith.index_cast %323 : i32 to index
    %c0_108 = arith.constant 0 : index
    %325 = vector.load %arg3[%324, %c0_108] : memref<56x128xf32, #tpu.memory_space<vmem>>, vector<1x128xf32>
    %c52 = arith.constant 52 : index
    %c0_109 = arith.constant 0 : index
    %326 = vector.load %arg5[%c52, %c0_109] : memref<64x128xf32, #tpu.memory_space<vmem>>, vector<1x128xf32>
    tpu.vector_store %arg5[%c52, %c0_109], %325 {strides = array<i32>} : memref<64x128xf32, #tpu.memory_space<vmem>>, vector<1x128xf32>,
    %c53_i32 = arith.constant 53 : i32
    %327 = arith.addi %0, %c53_i32 : i32
    %328 = arith.index_cast %327 : i32 to index
    %329 = memref.load %arg1[%328] : memref<64xi32, #tpu.memory_space<smem>>
    %330 = arith.index_cast %329 : i32 to index
    %c0_110 = arith.constant 0 : index
    %331 = vector.load %arg3[%330, %c0_110] : memref<56x128xf32, #tpu.memory_space<vmem>>, vector<1x128xf32>
    %c53 = arith.constant 53 : index
    %c0_111 = arith.constant 0 : index
    %332 = vector.load %arg5[%c53, %c0_111] : memref<64x128xf32, #tpu.memory_space<vmem>>, vector<1x128xf32>
    tpu.vector_store %arg5[%c53, %c0_111], %331 {strides = array<i32>} : memref<64x128xf32, #tpu.memory_space<vmem>>, vector<1x128xf32>,
    %c54_i32 = arith.constant 54 : i32
    %333 = arith.addi %0, %c54_i32 : i32
    %334 = arith.index_cast %333 : i32 to index
    %335 = memref.load %arg1[%334] : memref<64xi32, #tpu.memory_space<smem>>
    %336 = arith.index_cast %335 : i32 to index
    %c0_112 = arith.constant 0 : index
    %337 = vector.load %arg3[%336, %c0_112] : memref<56x128xf32, #tpu.memory_space<vmem>>, vector<1x128xf32>
    %c54 = arith.constant 54 : index
    %c0_113 = arith.constant 0 : index
    %338 = vector.load %arg5[%c54, %c0_113] : memref<64x128xf32, #tpu.memory_space<vmem>>, vector<1x128xf32>
    tpu.vector_store %arg5[%c54, %c0_113], %337 {strides = array<i32>} : memref<64x128xf32, #tpu.memory_space<vmem>>, vector<1x128xf32>,
    %c55_i32 = arith.constant 55 : i32
    %339 = arith.addi %0, %c55_i32 : i32
    %340 = arith.index_cast %339 : i32 to index
    %341 = memref.load %arg1[%340] : memref<64xi32, #tpu.memory_space<smem>>
    %342 = arith.index_cast %341 : i32 to index
    %c0_114 = arith.constant 0 : index
    %343 = vector.load %arg3[%342, %c0_114] : memref<56x128xf32, #tpu.memory_space<vmem>>, vector<1x128xf32>
    %c55 = arith.constant 55 : index
    %c0_115 = arith.constant 0 : index
    %344 = vector.load %arg5[%c55, %c0_115] : memref<64x128xf32, #tpu.memory_space<vmem>>, vector<1x128xf32>
    tpu.vector_store %arg5[%c55, %c0_115], %343 {strides = array<i32>} : memref<64x128xf32, #tpu.memory_space<vmem>>, vector<1x128xf32>,
    %c56_i32 = arith.constant 56 : i32
    %345 = arith.addi %0, %c56_i32 : i32
    %346 = arith.index_cast %345 : i32 to index
    %347 = memref.load %arg1[%346] : memref<64xi32, #tpu.memory_space<smem>>
    %348 = arith.index_cast %347 : i32 to index
    %c0_116 = arith.constant 0 : index
    %349 = vector.load %arg3[%348, %c0_116] : memref<56x128xf32, #tpu.memory_space<vmem>>, vector<1x128xf32>
    %c56 = arith.constant 56 : index
    %c0_117 = arith.constant 0 : index
    %350 = vector.load %arg5[%c56, %c0_117] : memref<64x128xf32, #tpu.memory_space<vmem>>, vector<1x128xf32>
    tpu.vector_store %arg5[%c56, %c0_117], %349 {strides = array<i32>} : memref<64x128xf32, #tpu.memory_space<vmem>>, vector<1x128xf32>,
    %c57_i32 = arith.constant 57 : i32
    %351 = arith.addi %0, %c57_i32 : i32
    %352 = arith.index_cast %351 : i32 to index
    %353 = memref.load %arg1[%352] : memref<64xi32, #tpu.memory_space<smem>>
    %354 = arith.index_cast %353 : i32 to index
    %c0_118 = arith.constant 0 : index
    %355 = vector.load %arg3[%354, %c0_118] : memref<56x128xf32, #tpu.memory_space<vmem>>, vector<1x128xf32>
    %c57 = arith.constant 57 : index
    %c0_119 = arith.constant 0 : index
    %356 = vector.load %arg5[%c57, %c0_119] : memref<64x128xf32, #tpu.memory_space<vmem>>, vector<1x128xf32>
    tpu.vector_store %arg5[%c57, %c0_119], %355 {strides = array<i32>} : memref<64x128xf32, #tpu.memory_space<vmem>>, vector<1x128xf32>,
    %c58_i32 = arith.constant 58 : i32
    %357 = arith.addi %0, %c58_i32 : i32
    %358 = arith.index_cast %357 : i32 to index
    %359 = memref.load %arg1[%358] : memref<64xi32, #tpu.memory_space<smem>>
    %360 = arith.index_cast %359 : i32 to index
    %c0_120 = arith.constant 0 : index
    %361 = vector.load %arg3[%360, %c0_120] : memref<56x128xf32, #tpu.memory_space<vmem>>, vector<1x128xf32>
    %c58 = arith.constant 58 : index
    %c0_121 = arith.constant 0 : index
    %362 = vector.load %arg5[%c58, %c0_121] : memref<64x128xf32, #tpu.memory_space<vmem>>, vector<1x128xf32>
    tpu.vector_store %arg5[%c58, %c0_121], %361 {strides = array<i32>} : memref<64x128xf32, #tpu.memory_space<vmem>>, vector<1x128xf32>,
    %c59_i32 = arith.constant 59 : i32
    %363 = arith.addi %0, %c59_i32 : i32
    %364 = arith.index_cast %363 : i32 to index
    %365 = memref.load %arg1[%364] : memref<64xi32, #tpu.memory_space<smem>>
    %366 = arith.index_cast %365 : i32 to index
    %c0_122 = arith.constant 0 : index
    %367 = vector.load %arg3[%366, %c0_122] : memref<56x128xf32, #tpu.memory_space<vmem>>, vector<1x128xf32>
    %c59 = arith.constant 59 : index
    %c0_123 = arith.constant 0 : index
    %368 = vector.load %arg5[%c59, %c0_123] : memref<64x128xf32, #tpu.memory_space<vmem>>, vector<1x128xf32>
    tpu.vector_store %arg5[%c59, %c0_123], %367 {strides = array<i32>} : memref<64x128xf32, #tpu.memory_space<vmem>>, vector<1x128xf32>,
    %c60_i32 = arith.constant 60 : i32
    %369 = arith.addi %0, %c60_i32 : i32
    %370 = arith.index_cast %369 : i32 to index
    %371 = memref.load %arg1[%370] : memref<64xi32, #tpu.memory_space<smem>>
    %372 = arith.index_cast %371 : i32 to index
    %c0_124 = arith.constant 0 : index
    %373 = vector.load %arg3[%372, %c0_124] : memref<56x128xf32, #tpu.memory_space<vmem>>, vector<1x128xf32>
    %c60 = arith.constant 60 : index
    %c0_125 = arith.constant 0 : index
    %374 = vector.load %arg5[%c60, %c0_125] : memref<64x128xf32, #tpu.memory_space<vmem>>, vector<1x128xf32>
    tpu.vector_store %arg5[%c60, %c0_125], %373 {strides = array<i32>} : memref<64x128xf32, #tpu.memory_space<vmem>>, vector<1x128xf32>,
    %c61_i32 = arith.constant 61 : i32
    %375 = arith.addi %0, %c61_i32 : i32
    %376 = arith.index_cast %375 : i32 to index
    %377 = memref.load %arg1[%376] : memref<64xi32, #tpu.memory_space<smem>>
    %378 = arith.index_cast %377 : i32 to index
    %c0_126 = arith.constant 0 : index
    %379 = vector.load %arg3[%378, %c0_126] : memref<56x128xf32, #tpu.memory_space<vmem>>, vector<1x128xf32>
    %c61 = arith.constant 61 : index
    %c0_127 = arith.constant 0 : index
    %380 = vector.load %arg5[%c61, %c0_127] : memref<64x128xf32, #tpu.memory_space<vmem>>, vector<1x128xf32>
    tpu.vector_store %arg5[%c61, %c0_127], %379 {strides = array<i32>} : memref<64x128xf32, #tpu.memory_space<vmem>>, vector<1x128xf32>,
    %c62_i32 = arith.constant 62 : i32
    %381 = arith.addi %0, %c62_i32 : i32
    %382 = arith.index_cast %381 : i32 to index
    %383 = memref.load %arg1[%382] : memref<64xi32, #tpu.memory_space<smem>>
    %384 = arith.index_cast %383 : i32 to index
    %c0_128 = arith.constant 0 : index
    %385 = vector.load %arg3[%384, %c0_128] : memref<56x128xf32, #tpu.memory_space<vmem>>, vector<1x128xf32>
    %c62 = arith.constant 62 : index
    %c0_129 = arith.constant 0 : index
    %386 = vector.load %arg5[%c62, %c0_129] : memref<64x128xf32, #tpu.memory_space<vmem>>, vector<1x128xf32>
    tpu.vector_store %arg5[%c62, %c0_129], %385 {strides = array<i32>} : memref<64x128xf32, #tpu.memory_space<vmem>>, vector<1x128xf32>,
    %c63_i32 = arith.constant 63 : i32
    %387 = arith.addi %0, %c63_i32 : i32
    %388 = arith.index_cast %387 : i32 to index
    %389 = memref.load %arg1[%388] : memref<64xi32, #tpu.memory_space<smem>>
    %390 = arith.index_cast %389 : i32 to index
    %c0_130 = arith.constant 0 : index
    %391 = vector.load %arg3[%390, %c0_130] : memref<56x128xf32, #tpu.memory_space<vmem>>, vector<1x128xf32>
    %c63 = arith.constant 63 : index
    %c0_131 = arith.constant 0 : index
    %392 = vector.load %arg5[%c63, %c0_131] : memref<64x128xf32, #tpu.memory_space<vmem>>, vector<1x128xf32>
    tpu.vector_store %arg5[%c63, %c0_131], %391 {strides = array<i32>} : memref<64x128xf32, #tpu.memory_space<vmem>>, vector<1x128xf32>,
    %c0_132 = arith.constant 0 : index
    %c0_133 = arith.constant 0 : index
    %393 = vector.load %arg5[%c0_132, %c0_133] : memref<64x128xf32, #tpu.memory_space<vmem>>, vector<64x128xf32>
    %394 = vector.shape_cast %393 : vector<64x128xf32> to vector<8x8x128xf32>
    %395 = vector.broadcast %6 : vector<8x8x1xf32> to vector<8x8x128xf32>
    %396 = arith.mulf %395, %394 : vector<8x8x128xf32>
    %cst_134 = arith.constant dense<0.000000e+00> : vector<8x128xf32>
    %397 = vector.multi_reduction <add>, %396, %cst_134 [1] : vector<8x8x128xf32> to vector<8x128xf32>
    %398 = vector.shape_cast %8 : vector<8x1x1xf32> to vector<8x1xf32>
    %399 = vector.broadcast %398 : vector<8x1xf32> to vector<8x128xf32>
    %400 = arith.divf %397, %399 : vector<8x128xf32>
    %c0_135 = arith.constant 0 : index
    %c0_136 = arith.constant 0 : index
    %401 = vector.load %arg4[%c0_135, %c0_136] : memref<8x128xf32, #tpu.memory_space<vmem>>, vector<8x128xf32>
    tpu.vector_store %arg4[%c0_135, %c0_136], %400 {strides = array<i32>} : memref<8x128xf32, #tpu.memory_space<vmem>>, vector<8x128xf32>,
    return
  }
  func.func @transform_0(%arg0: i32, %arg1: memref<64xi32, #tpu.memory_space<smem>>) -> (i32, i32, i32) {
    %c0_i32 = arith.constant 0 : i32
    %c0_i32_0 = arith.constant 0 : i32
    %c0_i32_1 = arith.constant 0 : i32
    return %arg0, %c0_i32, %c0_i32_0 : i32, i32, i32
  }
  func.func @transform_1(%arg0: i32, %arg1: memref<64xi32, #tpu.memory_space<smem>>) -> (i32, i32) {
    %c0_i32 = arith.constant 0 : i32
    %c0_i32_0 = arith.constant 0 : i32
    %c0_i32_1 = arith.constant 0 : i32
    return %c0_i32, %c0_i32_0 : i32, i32
  }
  func.func @transform_2(%arg0: i32, %arg1: memref<64xi32, #tpu.memory_space<smem>>) -> (i32, i32) {
    %c0_i32 = arith.constant 0 : i32
    %c0_i32_0 = arith.constant 0 : i32
    return %arg0, %c0_i32 : i32, i32
  }
}

</mosaic_0001>

<llo_original>
// kernel: tpu_custom_call.1
$region0: #{tpu_custom_call.1}
  #allocation0 [shape = 'u32[]', space=smem, size = 0x4, offset = 0x4, fixed_abs, tag = 'smem constant byte address 0x4 - core index']
  #allocation1 [shape = 'u32[144,128]{1,0:T(1,128)}', space=vmem, size = 0x12000, scoped, tag = 'internal scratch']
  #allocation2 [shape = 'f32[64,128]{1,0:T(8,128)}', space=vmem, size = 0x8000, scoped, tag = 'scratch operand']
  #allocation3 [shape = 's32[1]{0}', space=sflag, size = 0x4, scoped, tag = 'scoped memory for tpu_custom_call.1']
  #allocation4 [shape = 'u8[512]{0}', space=smem, size = 0x200, scoped, tag = 'prefetched SMEM operand 0']
  %s0 = inlined_call_operand.vmem [shape: s32[64], index: 0, kind: input, shape index: {}]
  %s1 = inlined_call_operand.vmem [shape: f32[8,8,1], index: 1, kind: input, shape index: {}]
  %s2 = inlined_call_operand.vmem [shape: f32[56,128], index: 2, kind: input, shape index: {}]
  %s3 = inlined_call_operand.hbm [shape: f32[8,128], index: 3, kind: output, shape index: {}]
  %s4 = sld [smem:[#allocation0]]
  $region18: #{tpu_custom_call.1} parent=0
    _
  %s6 = ssub.s32 1, %s4
  %s7 = scalar_select 0, %s6, %s4
  %s8 = sshll.u32 %s0, 4
  %s9 = int_to_ptr.vmem [resolvable:$true] %s8
  %11 = dma.vmem_to_smem %s9, 16, [#allocation4], [#allocation3]
  %12 = dma.done [#allocation3], 16
  %13 = sfence
  $region1: #{tpu_custom_call.1} parent=0
    #allocation5 [shape = 'u8[4096]{0}', space=vmem, size = 0x1000, scoped, tag = 'output window, operand 0, single buffered']
    #allocation6 [shape = 's32[1]{0}', space=sflag, size = 0x4, scoped, tag = 'scoped memory for tpu_custom_call.1']
    %14 = vsyncpa [#allocation6], 0
    // Predicated region
    $region2: #{tpu_custom_call.1} parent=1 // pred_check
      _
    $region3: #{tpu_custom_call.1} parent=1 // pred_check_branch
      %16 = sbr.rel (0) target = $region5
    $region4: #{tpu_custom_call.1} parent=1 // pred_region
      _
    $region5: #{tpu_custom_call.1} parent=1 // pred_fallthru
      _
    // Predicated region
    $region6: #{tpu_custom_call.1} parent=1 // pred_check
      _
    $region7: #{tpu_custom_call.1} parent=1 // pred_check_branch
      %18 = sbr.rel (0) target = $region9
    $region8: #{tpu_custom_call.1} parent=1 // pred_region
      _
    $region9: #{tpu_custom_call.1} parent=1 // pred_fallthru
      _
    %s19 = smul.u32 0, 64
    %v20 = vld [vmem:[%s1] sm:$0xff]
    %v21 = vld [vmem:[%s1 + $0x8] sm:$0xff]
    %v22 = vld [vmem:[%s1 + $0x10] sm:$0xff]
    %v23 = vld [vmem:[%s1 + $0x18] sm:$0xff]
    %v24 = vld [vmem:[%s1 + $0x20] sm:$0xff]
    %v25 = vld [vmem:[%s1 + $0x28] sm:$0xff]
    %v26 = vld [vmem:[%s1 + $0x30] sm:$0xff]
    %v27 = vld [vmem:[%s1 + $0x38] sm:$0xff]
    %vm28 = vcmask 7168
    %v29 = vsel %vm28, %v20, -inf
    %v30 = vrot.slane %v29, 4
    %v31 = vmax.f32 %v29, %v30
    %v32 = vrot.slane %v31, 2
    %v33 = vmax.f32 %v31, %v32
    %v34 = vrot.slane %v33, 1
    %v35 = vmax.f32 %v33, %v34
    %v36 = vsel %vm28, %v21, -inf
    %v37 = vrot.slane %v36, 4
    %v38 = vmax.f32 %v36, %v37
    %v39 = vrot.slane %v38, 2
    %v40 = vmax.f32 %v38, %v39
    %v41 = vrot.slane %v40, 1
    %v42 = vmax.f32 %v40, %v41
    %v43 = vsel %vm28, %v22, -inf
    %v44 = vrot.slane %v43, 4
    %v45 = vmax.f32 %v43, %v44
    %v46 = vrot.slane %v45, 2
    %v47 = vmax.f32 %v45, %v46
    %v48 = vrot.slane %v47, 1
    %v49 = vmax.f32 %v47, %v48
    %v50 = vsel %vm28, %v23, -inf
    %v51 = vrot.slane %v50, 4
    %v52 = vmax.f32 %v50, %v51
    %v53 = vrot.slane %v52, 2
    %v54 = vmax.f32 %v52, %v53
    %v55 = vrot.slane %v54, 1
    %v56 = vmax.f32 %v54, %v55
    %v57 = vsel %vm28, %v24, -inf
    %v58 = vrot.slane %v57, 4
    %v59 = vmax.f32 %v57, %v58
    %v60 = vrot.slane %v59, 2
    %v61 = vmax.f32 %v59, %v60
    %v62 = vrot.slane %v61, 1
    %v63 = vmax.f32 %v61, %v62
    %v64 = vsel %vm28, %v25, -inf
    %v65 = vrot.slane %v64, 4
    %v66 = vmax.f32 %v64, %v65
    %v67 = vrot.slane %v66, 2
    %v68 = vmax.f32 %v66, %v67
    %v69 = vrot.slane %v68, 1
    %v70 = vmax.f32 %v68, %v69
    %v71 = vsel %vm28, %v26, -inf
    %v72 = vrot.slane %v71, 4
    %v73 = vmax.f32 %v71, %v72
    %v74 = vrot.slane %v73, 2
    %v75 = vmax.f32 %v73, %v74
    %v76 = vrot.slane %v75, 1
    %v77 = vmax.f32 %v75, %v76
    %v78 = vsel %vm28, %v27, -inf
    %v79 = vrot.slane %v78, 4
    %v80 = vmax.f32 %v78, %v79
    %v81 = vrot.slane %v80, 2
    %v82 = vmax.f32 %v80, %v81
    %v83 = vrot.slane %v82, 1
    %v84 = vmax.f32 %v82, %v83
    %v85 = vsub.f32 %v20, %v35
    %v86 = vsub.f32 %v21, %v42
    %v87 = vsub.f32 %v22, %v49
    %v88 = vsub.f32 %v23, %v56
    %v89 = vsub.f32 %v24, %v63
    %v90 = vsub.f32 %v25, %v70
    %v91 = vsub.f32 %v26, %v77
    %v92 = vsub.f32 %v27, %v84
    %v93 = vmul.f32 %v85, 1.442695
    %v94 = vpow.pop %v93
    %v95 = vmul.f32 %v86, 1.442695
    %v96 = vpow.pop %v95
    %v97 = vmul.f32 %v87, 1.442695
    %v98 = vpow.pop %v97
    %v99 = vmul.f32 %v88, 1.442695
    %v100 = vpow.pop %v99
    %v101 = vmul.f32 %v89, 1.442695
    %v102 = vpow.pop %v101
    %v103 = vmul.f32 %v90, 1.442695
    %v104 = vpow.pop %v103
    %v105 = vmul.f32 %v91, 1.442695
    %v106 = vpow.pop %v105
    %v107 = vmul.f32 %v92, 1.442695
    %v108 = vpow.pop %v107
    %v109 = vsel %vm28, %v94, 0.0
    %v110 = vrot.slane %v109, 4
    %v111 = vadd.f32 %v109, %v110
    %v112 = vrot.slane %v111, 2
    %v113 = vadd.f32 %v111, %v112
    %v114 = vrot.slane %v113, 1
    %v115 = vadd.f32 %v113, %v114
    %v116 = vsel %vm28, %v96, 0.0
    %v117 = vrot.slane %v116, 4
    %v118 = vadd.f32 %v116, %v117
    %v119 = vrot.slane %v118, 2
    %v120 = vadd.f32 %v118, %v119
    %v121 = vrot.slane %v120, 1
    %v122 = vadd.f32 %v120, %v121
    %v123 = vsel %vm28, %v98, 0.0
    %v124 = vrot.slane %v123, 4
    %v125 = vadd.f32 %v123, %v124
    %v126 = vrot.slane %v125, 2
    %v127 = vadd.f32 %v125, %v126
    %v128 = vrot.slane %v127, 1
    %v129 = vadd.f32 %v127, %v128
    %v130 = vsel %vm28, %v100, 0.0
    %v131 = vrot.slane %v130, 4
    %v132 = vadd.f32 %v130, %v131
    %v133 = vrot.slane %v132, 2
    %v134 = vadd.f32 %v132, %v133
    %v135 = vrot.slane %v134, 1
    %v136 = vadd.f32 %v134, %v135
    %v137 = vsel %vm28, %v102, 0.0
    %v138 = vrot.slane %v137, 4
    %v139 = vadd.f32 %v137, %v138
    %v140 = vrot.slane %v139, 2
    %v141 = vadd.f32 %v139, %v140
    %v142 = vrot.slane %v141, 1
    %v143 = vadd.f32 %v141, %v142
    %v144 = vsel %vm28, %v104, 0.0
    %v145 = vrot.slane %v144, 4
    %v146 = vadd.f32 %v144, %v145
    %v147 = vrot.slane %v146, 2
    %v148 = vadd.f32 %v146, %v147
    %v149 = vrot.slane %v148, 1
    %v150 = vadd.f32 %v148, %v149
    %v151 = vsel %vm28, %v106, 0.0
    %v152 = vrot.slane %v151, 4
    %v153 = vadd.f32 %v151, %v152
    %v154 = vrot.slane %v153, 2
    %v155 = vadd.f32 %v153, %v154
    %v156 = vrot.slane %v155, 1
    %v157 = vadd.f32 %v155, %v156
    %v158 = vsel %vm28, %v108, 0.0
    %v159 = vrot.slane %v158, 4
    %v160 = vadd.f32 %v158, %v159
    %v161 = vrot.slane %v160, 2
    %v162 = vadd.f32 %v160, %v161
    %v163 = vrot.slane %v162, 1
    %v164 = vadd.f32 %v162, %v163
    %s165 = sld [smem:[#allocation4 + %s19]]
    %s166 = scalar_lea.vmem %s2, %s165
    %v167 = vld [vmem:[%s166] sm:$0x1]
    %168 = vst [vmem:[#allocation2] sm:$0x1] %v167
    %s169 = sadd.s32 %s19, 1
    %s170 = sld [smem:[#allocation4 + %s169]]
    %s171 = scalar_lea.vmem %s2, %s170
    %v172 = vld [vmem:[%s171] sm:$0x1]
    %173 = vst [vmem:[#allocation2 + $0x1] sm:$0x1] %v172
    %s174 = sadd.s32 %s19, 2
    %s175 = sld [smem:[#allocation4 + %s174]]
    %s176 = scalar_lea.vmem %s2, %s175
    %v177 = vld [vmem:[%s176] sm:$0x1]
    %178 = vst [vmem:[#allocation2 + $0x2] sm:$0x1] %v177
    %s179 = sadd.s32 %s19, 3
    %s180 = sld [smem:[#allocation4 + %s179]]
    %s181 = scalar_lea.vmem %s2, %s180
    %v182 = vld [vmem:[%s181] sm:$0x1]
    %183 = vst [vmem:[#allocation2 + $0x3] sm:$0x1] %v182
    %s184 = sadd.s32 %s19, 4
    %s185 = sld [smem:[#allocation4 + %s184]]
    %s186 = scalar_lea.vmem %s2, %s185
    %v187 = vld [vmem:[%s186] sm:$0x1]
    %188 = vst [vmem:[#allocation2 + $0x4] sm:$0x1] %v187
    %s189 = sadd.s32 %s19, 5
    %s190 = sld [smem:[#allocation4 + %s189]]
    %s191 = scalar_lea.vmem %s2, %s190
    %v192 = vld [vmem:[%s191] sm:$0x1]
    %193 = vst [vmem:[#allocation2 + $0x5] sm:$0x1] %v192
    %s194 = sadd.s32 %s19, 6
    %s195 = sld [smem:[#allocation4 + %s194]]
    %s196 = scalar_lea.vmem %s2, %s195
    %v197 = vld [vmem:[%s196] sm:$0x1]
    %198 = vst [vmem:[#allocation2 + $0x6] sm:$0x1] %v197
    %s199 = sadd.s32 %s19, 7
    %s200 = sld [smem:[#allocation4 + %s199]]
    %s201 = scalar_lea.vmem %s2, %s200
    %v202 = vld [vmem:[%s201] sm:$0x1]
    %203 = vst [vmem:[#allocation2 + $0x7] sm:$0x1] %v202
    %s204 = sadd.s32 %s19, 8
    %s205 = sld [smem:[#allocation4 + %s204]]
    %s206 = scalar_lea.vmem %s2, %s205
    %v207 = vld [vmem:[%s206] sm:$0x1]
    %208 = vst [vmem:[#allocation2 + $0x8] sm:$0x1] %v207
    %s209 = sadd.s32 %s19, 9
    %s210 = sld [smem:[#allocation4 + %s209]]
    %s211 = scalar_lea.vmem %s2, %s210
    %v212 = vld [vmem:[%s211] sm:$0x1]
    %213 = vst [vmem:[#allocation2 + $0x9] sm:$0x1] %v212
    %s214 = sadd.s32 %s19, 10
    %s215 = sld [smem:[#allocation4 + %s214]]
    %s216 = scalar_lea.vmem %s2, %s215
    %v217 = vld [vmem:[%s216] sm:$0x1]
    %218 = vst [vmem:[#allocation2 + $0xa] sm:$0x1] %v217
    %s219 = sadd.s32 %s19, 11
    %s220 = sld [smem:[#allocation4 + %s219]]
    %s221 = scalar_lea.vmem %s2, %s220
    %v222 = vld [vmem:[%s221] sm:$0x1]
    %223 = vst [vmem:[#allocation2 + $0xb] sm:$0x1] %v222
    %s224 = sadd.s32 %s19, 12
    %s225 = sld [smem:[#allocation4 + %s224]]
    %s226 = scalar_lea.vmem %s2, %s225
    %v227 = vld [vmem:[%s226] sm:$0x1]
    %228 = vst [vmem:[#allocation2 + $0xc] sm:$0x1] %v227
    %s229 = sadd.s32 %s19, 13
    %s230 = sld [smem:[#allocation4 + %s229]]
    %s231 = scalar_lea.vmem %s2, %s230
    %v232 = vld [vmem:[%s231] sm:$0x1]
    %233 = vst [vmem:[#allocation2 + $0xd] sm:$0x1] %v232
    %s234 = sadd.s32 %s19, 14
    %s235 = sld [smem:[#allocation4 + %s234]]
    %s236 = scalar_lea.vmem %s2, %s235
    %v237 = vld [vmem:[%s236] sm:$0x1]
    %238 = vst [vmem:[#allocation2 + $0xe] sm:$0x1] %v237
    %s239 = sadd.s32 %s19, 15
    %s240 = sld [smem:[#allocation4 + %s239]]
    %s241 = scalar_lea.vmem %s2, %s240
    %v242 = vld [vmem:[%s241] sm:$0x1]
    %243 = vst [vmem:[#allocation2 + $0xf] sm:$0x1] %v242
    %s244 = sadd.s32 %s19, 16
    %s245 = sld [smem:[#allocation4 + %s244]]
    %s246 = scalar_lea.vmem %s2, %s245
    %v247 = vld [vmem:[%s246] sm:$0x1]
    %248 = vst [vmem:[#allocation2 + $0x10] sm:$0x1] %v247
    %s249 = sadd.s32 %s19, 17
    %s250 = sld [smem:[#allocation4 + %s249]]
    %s251 = scalar_lea.vmem %s2, %s250
    %v252 = vld [vmem:[%s251] sm:$0x1]
    %253 = vst [vmem:[#allocation2 + $0x11] sm:$0x1] %v252
    %s254 = sadd.s32 %s19, 18
    %s255 = sld [smem:[#allocation4 + %s254]]
    %s256 = scalar_lea.vmem %s2, %s255
    %v257 = vld [vmem:[%s256] sm:$0x1]
    %258 = vst [vmem:[#allocation2 + $0x12] sm:$0x1] %v257
    %s259 = sadd.s32 %s19, 19
    %s260 = sld [smem:[#allocation4 + %s259]]
    %s261 = scalar_lea.vmem %s2, %s260
    %v262 = vld [vmem:[%s261] sm:$0x1]
    %263 = vst [vmem:[#allocation2 + $0x13] sm:$0x1] %v262
    %s264 = sadd.s32 %s19, 20
    %s265 = sld [smem:[#allocation4 + %s264]]
    %s266 = scalar_lea.vmem %s2, %s265
    %v267 = vld [vmem:[%s266] sm:$0x1]
    %268 = vst [vmem:[#allocation2 + $0x14] sm:$0x1] %v267
    %s269 = sadd.s32 %s19, 21
    %s270 = sld [smem:[#allocation4 + %s269]]
    %s271 = scalar_lea.vmem %s2, %s270
    %v272 = vld [vmem:[%s271] sm:$0x1]
    %273 = vst [vmem:[#allocation2 + $0x15] sm:$0x1] %v272
    %s274 = sadd.s32 %s19, 22
    %s275 = sld [smem:[#allocation4 + %s274]]
    %s276 = scalar_lea.vmem %s2, %s275
    %v277 = vld [vmem:[%s276] sm:$0x1]
    %278 = vst [vmem:[#allocation2 + $0x16] sm:$0x1] %v277
    %s279 = sadd.s32 %s19, 23
    %s280 = sld [smem:[#allocation4 + %s279]]
    %s281 = scalar_lea.vmem %s2, %s280
    %v282 = vld [vmem:[%s281] sm:$0x1]
    %283 = vst [vmem:[#allocation2 + $0x17] sm:$0x1] %v282
    %s284 = sadd.s32 %s19, 24
    %s285 = sld [smem:[#allocation4 + %s284]]
    %s286 = scalar_lea.vmem %s2, %s285
    %v287 = vld [vmem:[%s286] sm:$0x1]
    %288 = vst [vmem:[#allocation2 + $0x18] sm:$0x1] %v287
    %s289 = sadd.s32 %s19, 25
    %s290 = sld [smem:[#allocation4 + %s289]]
    %s291 = scalar_lea.vmem %s2, %s290
    %v292 = vld [vmem:[%s291] sm:$0x1]
    %293 = vst [vmem:[#allocation2 + $0x19] sm:$0x1] %v292
    %s294 = sadd.s32 %s19, 26
    %s295 = sld [smem:[#allocation4 + %s294]]
    %s296 = scalar_lea.vmem %s2, %s295
    %v297 = vld [vmem:[%s296] sm:$0x1]
    %298 = vst [vmem:[#allocation2 + $0x1a] sm:$0x1] %v297
    %s299 = sadd.s32 %s19, 27
    %s300 = sld [smem:[#allocation4 + %s299]]
    %s301 = scalar_lea.vmem %s2, %s300
    %v302 = vld [vmem:[%s301] sm:$0x1]
    %303 = vst [vmem:[#allocation2 + $0x1b] sm:$0x1] %v302
    %s304 = sadd.s32 %s19, 28
    %s305 = sld [smem:[#allocation4 + %s304]]
    %s306 = scalar_lea.vmem %s2, %s305
    %v307 = vld [vmem:[%s306] sm:$0x1]
    %308 = vst [vmem:[#allocation2 + $0x1c] sm:$0x1] %v307
    %s309 = sadd.s32 %s19, 29
    %s310 = sld [smem:[#allocation4 + %s309]]
    %s311 = scalar_lea.vmem %s2, %s310
    %v312 = vld [vmem:[%s311] sm:$0x1]
    %313 = vst [vmem:[#allocation2 + $0x1d] sm:$0x1] %v312
    %s314 = sadd.s32 %s19, 30
    %s315 = sld [smem:[#allocation4 + %s314]]
    %s316 = scalar_lea.vmem %s2, %s315
    %v317 = vld [vmem:[%s316] sm:$0x1]
    %318 = vst [vmem:[#allocation2 + $0x1e] sm:$0x1] %v317
    %s319 = sadd.s32 %s19, 31
    %s320 = sld [smem:[#allocation4 + %s319]]
    %s321 = scalar_lea.vmem %s2, %s320
    %v322 = vld [vmem:[%s321] sm:$0x1]
    %323 = vst [vmem:[#allocation2 + $0x1f] sm:$0x1] %v322
    %s324 = sadd.s32 %s19, 32
    %s325 = sld [smem:[#allocation4 + %s324]]
    %s326 = scalar_lea.vmem %s2, %s325
    %v327 = vld [vmem:[%s326] sm:$0x1]
    %328 = vst [vmem:[#allocation2 + $0x20] sm:$0x1] %v327
    %s329 = sadd.s32 %s19, 33
    %s330 = sld [smem:[#allocation4 + %s329]]
    %s331 = scalar_lea.vmem %s2, %s330
    %v332 = vld [vmem:[%s331] sm:$0x1]
    %333 = vst [vmem:[#allocation2 + $0x21] sm:$0x1] %v332
    %s334 = sadd.s32 %s19, 34
    %s335 = sld [smem:[#allocation4 + %s334]]
    %s336 = scalar_lea.vmem %s2, %s335
    %v337 = vld [vmem:[%s336] sm:$0x1]
    %338 = vst [vmem:[#allocation2 + $0x22] sm:$0x1] %v337
    %s339 = sadd.s32 %s19, 35
    %s340 = sld [smem:[#allocation4 + %s339]]
    %s341 = scalar_lea.vmem %s2, %s340
    %v342 = vld [vmem:[%s341] sm:$0x1]
    %343 = vst [vmem:[#allocation2 + $0x23] sm:$0x1] %v342
    %s344 = sadd.s32 %s19, 36
    %s345 = sld [smem:[#allocation4 + %s344]]
    %s346 = scalar_lea.vmem %s2, %s345
    %v347 = vld [vmem:[%s346] sm:$0x1]
    %348 = vst [vmem:[#allocation2 + $0x24] sm:$0x1] %v347
    %s349 = sadd.s32 %s19, 37
    %s350 = sld [smem:[#allocation4 + %s349]]
    %s351 = scalar_lea.vmem %s2, %s350
    %v352 = vld [vmem:[%s351] sm:$0x1]
    %353 = vst [vmem:[#allocation2 + $0x25] sm:$0x1] %v352
    %s354 = sadd.s32 %s19, 38
    %s355 = sld [smem:[#allocation4 + %s354]]
    %s356 = scalar_lea.vmem %s2, %s355
    %v357 = vld [vmem:[%s356] sm:$0x1]
    %358 = vst [vmem:[#allocation2 + $0x26] sm:$0x1] %v357
    %s359 = sadd.s32 %s19, 39
    %s360 = sld [smem:[#allocation4 + %s359]]
    %s361 = scalar_lea.vmem %s2, %s360
    %v362 = vld [vmem:[%s361] sm:$0x1]
    %363 = vst [vmem:[#allocation2 + $0x27] sm:$0x1] %v362
    %s364 = sadd.s32 %s19, 40
    %s365 = sld [smem:[#allocation4 + %s364]]
    %s366 = scalar_lea.vmem %s2, %s365
    %v367 = vld [vmem:[%s366] sm:$0x1]
    %368 = vst [vmem:[#allocation2 + $0x28] sm:$0x1] %v367
    %s369 = sadd.s32 %s19, 41
    %s370 = sld [smem:[#allocation4 + %s369]]
    %s371 = scalar_lea.vmem %s2, %s370
    %v372 = vld [vmem:[%s371] sm:$0x1]
    %373 = vst [vmem:[#allocation2 + $0x29] sm:$0x1] %v372
    %s374 = sadd.s32 %s19, 42
    %s375 = sld [smem:[#allocation4 + %s374]]
    %s376 = scalar_lea.vmem %s2, %s375
    %v377 = vld [vmem:[%s376] sm:$0x1]
    %378 = vst [vmem:[#allocation2 + $0x2a] sm:$0x1] %v377
    %s379 = sadd.s32 %s19, 43
    %s380 = sld [smem:[#allocation4 + %s379]]
    %s381 = scalar_lea.vmem %s2, %s380
    %v382 = vld [vmem:[%s381] sm:$0x1]
    %383 = vst [vmem:[#allocation2 + $0x2b] sm:$0x1] %v382
    %s384 = sadd.s32 %s19, 44
    %s385 = sld [smem:[#allocation4 + %s384]]
    %s386 = scalar_lea.vmem %s2, %s385
    %v387 = vld [vmem:[%s386] sm:$0x1]
    %388 = vst [vmem:[#allocation2 + $0x2c] sm:$0x1] %v387
    %s389 = sadd.s32 %s19, 45
    %s390 = sld [smem:[#allocation4 + %s389]]
    %s391 = scalar_lea.vmem %s2, %s390
    %v392 = vld [vmem:[%s391] sm:$0x1]
    %393 = vst [vmem:[#allocation2 + $0x2d] sm:$0x1] %v392
    %s394 = sadd.s32 %s19, 46
    %s395 = sld [smem:[#allocation4 + %s394]]
    %s396 = scalar_lea.vmem %s2, %s395
    %v397 = vld [vmem:[%s396] sm:$0x1]
    %398 = vst [vmem:[#allocation2 + $0x2e] sm:$0x1] %v397
    %s399 = sadd.s32 %s19, 47
    %s400 = sld [smem:[#allocation4 + %s399]]
    %s401 = scalar_lea.vmem %s2, %s400
    %v402 = vld [vmem:[%s401] sm:$0x1]
    %403 = vst [vmem:[#allocation2 + $0x2f] sm:$0x1] %v402
    %s404 = sadd.s32 %s19, 48
    %s405 = sld [smem:[#allocation4 + %s404]]
    %s406 = scalar_lea.vmem %s2, %s405
    %v407 = vld [vmem:[%s406] sm:$0x1]
    %408 = vst [vmem:[#allocation2 + $0x30] sm:$0x1] %v407
    %s409 = sadd.s32 %s19, 49
    %s410 = sld [smem:[#allocation4 + %s409]]
    %s411 = scalar_lea.vmem %s2, %s410
    %v412 = vld [vmem:[%s411] sm:$0x1]
    %413 = vst [vmem:[#allocation2 + $0x31] sm:$0x1] %v412
    %s414 = sadd.s32 %s19, 50
    %s415 = sld [smem:[#allocation4 + %s414]]
    %s416 = scalar_lea.vmem %s2, %s415
    %v417 = vld [vmem:[%s416] sm:$0x1]
    %418 = vst [vmem:[#allocation2 + $0x32] sm:$0x1] %v417
    %s419 = sadd.s32 %s19, 51
    %s420 = sld [smem:[#allocation4 + %s419]]
    %s421 = scalar_lea.vmem %s2, %s420
    %v422 = vld [vmem:[%s421] sm:$0x1]
    %423 = vst [vmem:[#allocation2 + $0x33] sm:$0x1] %v422
    %s424 = sadd.s32 %s19, 52
    %s425 = sld [smem:[#allocation4 + %s424]]
    %s426 = scalar_lea.vmem %s2, %s425
    %v427 = vld [vmem:[%s426] sm:$0x1]
    %428 = vst [vmem:[#allocation2 + $0x34] sm:$0x1] %v427
    %s429 = sadd.s32 %s19, 53
    %s430 = sld [smem:[#allocation4 + %s429]]
    %s431 = scalar_lea.vmem %s2, %s430
    %v432 = vld [vmem:[%s431] sm:$0x1]
    %433 = vst [vmem:[#allocation2 + $0x35] sm:$0x1] %v432
    %s434 = sadd.s32 %s19, 54
    %s435 = sld [smem:[#allocation4 + %s434]]
    %s436 = scalar_lea.vmem %s2, %s435
    %v437 = vld [vmem:[%s436] sm:$0x1]
    %438 = vst [vmem:[#allocation2 + $0x36] sm:$0x1] %v437
    %s439 = sadd.s32 %s19, 55
    %s440 = sld [smem:[#allocation4 + %s439]]
    %s441 = scalar_lea.vmem %s2, %s440
    %v442 = vld [vmem:[%s441] sm:$0x1]
    %443 = vst [vmem:[#allocation2 + $0x37] sm:$0x1] %v442
    %s444 = sadd.s32 %s19, 56
    %s445 = sld [smem:[#allocation4 + %s444]]
    %s446 = scalar_lea.vmem %s2, %s445
    %v447 = vld [vmem:[%s446] sm:$0x1]
    %448 = vst [vmem:[#allocation2 + $0x38] sm:$0x1] %v447
    %s449 = sadd.s32 %s19, 57
    %s450 = sld [smem:[#allocation4 + %s449]]
    %s451 = scalar_lea.vmem %s2, %s450
    %v452 = vld [vmem:[%s451] sm:$0x1]
    %453 = vst [vmem:[#allocation2 + $0x39] sm:$0x1] %v452
    %s454 = sadd.s32 %s19, 58
    %s455 = sld [smem:[#allocation4 + %s454]]
    %s456 = scalar_lea.vmem %s2, %s455
    %v457 = vld [vmem:[%s456] sm:$0x1]
    %458 = vst [vmem:[#allocation2 + $0x3a] sm:$0x1] %v457
    %s459 = sadd.s32 %s19, 59
    %s460 = sld [smem:[#allocation4 + %s459]]
    %s461 = scalar_lea.vmem %s2, %s460
    %v462 = vld [vmem:[%s461] sm:$0x1]
    %463 = vst [vmem:[#allocation2 + $0x3b] sm:$0x1] %v462
    %s464 = sadd.s32 %s19, 60
    %s465 = sld [smem:[#allocation4 + %s464]]
    %s466 = scalar_lea.vmem %s2, %s465
    %v467 = vld [vmem:[%s466] sm:$0x1]
    %468 = vst [vmem:[#allocation2 + $0x3c] sm:$0x1] %v467
    %s469 = sadd.s32 %s19, 61
    %s470 = sld [smem:[#allocation4 + %s469]]
    %s471 = scalar_lea.vmem %s2, %s470
    %v472 = vld [vmem:[%s471] sm:$0x1]
    %473 = vst [vmem:[#allocation2 + $0x3d] sm:$0x1] %v472
    %s474 = sadd.s32 %s19, 62
    %s475 = sld [smem:[#allocation4 + %s474]]
    %s476 = scalar_lea.vmem %s2, %s475
    %v477 = vld [vmem:[%s476] sm:$0x1]
    %478 = vst [vmem:[#allocation2 + $0x3e] sm:$0x1] %v477
    %s479 = sadd.s32 %s19, 63
    %s480 = sld [smem:[#allocation4 + %s479]]
    %s481 = scalar_lea.vmem %s2, %s480
    %v482 = vld [vmem:[%s481] sm:$0x1]
    %483 = vst [vmem:[#allocation2 + $0x3f] sm:$0x1] %v482
    %v484 = vld [vmem:[#allocation2] sm:$0xff]
    %v485 = vld [vmem:[#allocation2 + $0x8] sm:$0xff]
    %v486 = vld [vmem:[#allocation2 + $0x10] sm:$0xff]
    %v487 = vld [vmem:[#allocation2 + $0x18] sm:$0xff]
    %v488 = vld [vmem:[#allocation2 + $0x20] sm:$0xff]
    %v489 = vld [vmem:[#allocation2 + $0x28] sm:$0xff]
    %v490 = vld [vmem:[#allocation2 + $0x30] sm:$0xff]
    %v491 = vld [vmem:[#allocation2 + $0x38] sm:$0xff]
    %493 = vset.pattern.permute.xlu0 0
    %494 = vperm.xlu0 %493, %v94
    %v495 = vpop.permute.xlu0 %494
    %498 = vset.pattern.permute.xlu0 0
    %499 = vperm.xlu0 %498, %v96
    %v500 = vpop.permute.xlu0 %499
    %503 = vset.pattern.permute.xlu0 0
    %504 = vperm.xlu0 %503, %v98
    %v505 = vpop.permute.xlu0 %504
    %508 = vset.pattern.permute.xlu0 0
    %509 = vperm.xlu0 %508, %v100
    %v510 = vpop.permute.xlu0 %509
    %513 = vset.pattern.permute.xlu0 0
    %514 = vperm.xlu0 %513, %v102
    %v515 = vpop.permute.xlu0 %514
    %518 = vset.pattern.permute.xlu0 0
    %519 = vperm.xlu0 %518, %v104
    %v520 = vpop.permute.xlu0 %519
    %523 = vset.pattern.permute.xlu0 0
    %524 = vperm.xlu0 %523, %v106
    %v525 = vpop.permute.xlu0 %524
    %528 = vset.pattern.permute.xlu0 0
    %529 = vperm.xlu0 %528, %v108
    %v530 = vpop.permute.xlu0 %529
    %v532 = vmul.f32 %v495, %v484
    %v533 = vmul.f32 %v500, %v485
    %v534 = vmul.f32 %v505, %v486
    %v535 = vmul.f32 %v510, %v487
    %v536 = vmul.f32 %v515, %v488
    %v537 = vmul.f32 %v520, %v489
    %v538 = vmul.f32 %v525, %v490
    %v539 = vmul.f32 %v530, %v491
    %v540 = vrot.slane %v532, 4
    %v541 = vadd.f32 %v532, %v540
    %v542 = vrot.slane %v541, 2
    %v543 = vadd.f32 %v541, %v542
    %v544 = vrot.slane %v543, 1
    %v545 = vadd.f32 %v543, %v544
    %v546 = vrot.slane %v533, 4
    %v547 = vadd.f32 %v533, %v546
    %v548 = vrot.slane %v547, 2
    %v549 = vadd.f32 %v547, %v548
    %v550 = vrot.slane %v549, 1
    %v551 = vadd.f32 %v549, %v550
    %v552 = vrot.slane %v534, 4
    %v553 = vadd.f32 %v534, %v552
    %v554 = vrot.slane %v553, 2
    %v555 = vadd.f32 %v553, %v554
    %v556 = vrot.slane %v555, 1
    %v557 = vadd.f32 %v555, %v556
    %v558 = vrot.slane %v535, 4
    %v559 = vadd.f32 %v535, %v558
    %v560 = vrot.slane %v559, 2
    %v561 = vadd.f32 %v559, %v560
    %v562 = vrot.slane %v561, 1
    %v563 = vadd.f32 %v561, %v562
    %v564 = vrot.slane %v536, 4
    %v565 = vadd.f32 %v536, %v564
    %v566 = vrot.slane %v565, 2
    %v567 = vadd.f32 %v565, %v566
    %v568 = vrot.slane %v567, 1
    %v569 = vadd.f32 %v567, %v568
    %v570 = vrot.slane %v537, 4
    %v571 = vadd.f32 %v537, %v570
    %v572 = vrot.slane %v571, 2
    %v573 = vadd.f32 %v571, %v572
    %v574 = vrot.slane %v573, 1
    %v575 = vadd.f32 %v573, %v574
    %v576 = vrot.slane %v538, 4
    %v577 = vadd.f32 %v538, %v576
    %v578 = vrot.slane %v577, 2
    %v579 = vadd.f32 %v577, %v578
    %v580 = vrot.slane %v579, 1
    %v581 = vadd.f32 %v579, %v580
    %v582 = vrot.slane %v539, 4
    %v583 = vadd.f32 %v539, %v582
    %v584 = vrot.slane %v583, 2
    %v585 = vadd.f32 %v583, %v584
    %v586 = vrot.slane %v585, 1
    %v587 = vadd.f32 %v585, %v586
    %589 = vset.pattern.permute.xlu0 0
    %590 = vperm.xlu0 %589, %v115
    %v591 = vpop.permute.xlu0 %590
    %594 = vset.pattern.permute.xlu0 0
    %595 = vperm.xlu0 %594, %v122
    %v596 = vpop.permute.xlu0 %595
    %599 = vset.pattern.permute.xlu0 0
    %600 = vperm.xlu0 %599, %v129
    %v601 = vpop.permute.xlu0 %600
    %604 = vset.pattern.permute.xlu0 0
    %605 = vperm.xlu0 %604, %v136
    %v606 = vpop.permute.xlu0 %605
    %609 = vset.pattern.permute.xlu0 0
    %610 = vperm.xlu0 %609, %v143
    %v611 = vpop.permute.xlu0 %610
    %614 = vset.pattern.permute.xlu0 0
    %615 = vperm.xlu0 %614, %v150
    %v616 = vpop.permute.xlu0 %615
    %619 = vset.pattern.permute.xlu0 0
    %620 = vperm.xlu0 %619, %v157
    %v621 = vpop.permute.xlu0 %620
    %624 = vset.pattern.permute.xlu0 0
    %625 = vperm.xlu0 %624, %v164
    %v626 = vpop.permute.xlu0 %625
    %v628 = vrcp.pop %v591
    %v629 = vmul.f32 %v545, %v628
    %v630 = vrcp.pop %v596
    %v631 = vmul.f32 %v551, %v630
    %v632 = vrcp.pop %v601
    %v633 = vmul.f32 %v557, %v632
    %v634 = vrcp.pop %v606
    %v635 = vmul.f32 %v563, %v634
    %v636 = vrcp.pop %v611
    %v637 = vmul.f32 %v569, %v636
    %v638 = vrcp.pop %v616
    %v639 = vmul.f32 %v575, %v638
    %v640 = vrcp.pop %v621
    %v641 = vmul.f32 %v581, %v640
    %v642 = vrcp.pop %v626
    %v643 = vmul.f32 %v587, %v642
    %vm652 = vcmask 1041409
    %v653 = vsel %vm652, %v631, %v629
    %vm654 = vcmask 1042434
    %v655 = vsel %vm654, %v633, %v653
    %vm656 = vcmask 1043459
    %v657 = vsel %vm656, %v635, %v655
    %vm658 = vcmask 1044484
    %v659 = vsel %vm658, %v637, %v657
    %vm660 = vcmask 1045509
    %v661 = vsel %vm660, %v639, %v659
    %vm662 = vcmask 1046534
    %v663 = vsel %vm662, %v641, %v661
    %vm664 = vcmask 1047559
    %v665 = vsel %vm664, %v643, %v663
    %667 = vst [vmem:[#allocation5] sm:$0xff] %v665
    // Predicated region
    $region10: #{tpu_custom_call.1} parent=1 // pred_check
      _
    $region11: #{tpu_custom_call.1} parent=1 // pred_check_branch
      %669 = sbr.rel (0) target = $region13
    $region12: #{tpu_custom_call.1} parent=1 // pred_region
      %s671 = ssub.s32 128, 128
      %672 = vsyncadd [#allocation6], %s671
      %s674 = sshll.u32 [#allocation5], 4
      %s675 = int_to_ptr.vmem [resolvable:$true] %s674
      %677 = dma.vmem_to_hbm [thread:$0]  %s675, 128, %s3, [#allocation6]
    $region13: #{tpu_custom_call.1} parent=1 // pred_fallthru
      _
    // Predicated region
    $region14: #{tpu_custom_call.1} parent=1 // pred_check
      _
    $region15: #{tpu_custom_call.1} parent=1 // pred_check_branch
      %679 = sbr.rel (0) target = $region17
    $region16: #{tpu_custom_call.1} parent=1 // pred_region
      %680 = dma.done [#allocation6], 128
    $region17: #{tpu_custom_call.1} parent=1 // pred_fallthru
      _
    %681 = vsyncpa [#allocation6], 1

</llo_original>
